<compile_context>
chip_gen: v5e
topology: v5e:2x2
jax: 0.10.0
libtpu: 0.0.40
codegen_flags: <defaults>
</compile_context>

<pallas_src>
import jax
import jax.numpy as jnp
from jax.experimental import pallas as pl
from jax.experimental.pallas import tpu as pltpu


def _round_up(x, m):
    return ((x + m - 1) // m) * m


def _pad_rows(tab, mult=8):
    n = tab.shape[0]
    n_pad = _round_up(n, mult)
    if n_pad == n:
        return tab
    return jnp.pad(tab, ((0, n_pad - n), (0, 0)))


def _choose_tiling(batch, tile_b):
    """Pick (tile, padded_batch, n_tiles): tile multiple of 8, padding bounded
    by one sublane quantum per tile, and >= 2 grid steps when batch allows so
    v7x's two TensorCores both get work."""
    tile_b = max(8, (tile_b // 8) * 8)
    bp8 = _round_up(max(batch, 1), 8)
    n = pl.cdiv(bp8, tile_b)
    if bp8 >= 16:
        n = max(n, 2)
    tb = _round_up(pl.cdiv(bp8, n), 8)
    n = pl.cdiv(bp8, tb)
    return tb, n * tb, n


def state_repr_kernel(uidx_ref, midx_ref, utab_ref, itab_ref,
                      convw_ref, convb_ref, wt_ref, lb_ref, out_ref):
    # uidx_ref : (TB, 1)   int32 VMEM  per-tile user indices
    # midx_ref : (TB, M)   int32 VMEM  per-tile memory-slot item indices
    # utab_ref : (Nu, E)   f32   VMEM  user embedding table (grid-resident)
    # itab_ref : (Ni, E)   f32   VMEM  item embedding table (grid-resident)
    # convw_ref: (M,)      f32   SMEM  Conv1d(M->1, k=1) weight
    # convb_ref: (1,)      f32   SMEM  Conv1d bias
    # wt_ref   : (3E, E)   f32   VMEM  Linear weight^T (grid-resident)
    # lb_ref   : (1, E)    f32   VMEM  Linear bias (grid-resident)
    # out_ref  : (TB, E)   f32   VMEM
    tb, e = out_ref.shape
    m_slots = midx_ref.shape[1]
    nu = utab_ref.shape[0]
    ni = itab_ref.shape[0]
    hi = jax.lax.Precision.HIGHEST

    # User embedding gather as one-hot @ resident table (one MXU push).
    u_onehot = (jax.lax.broadcasted_iota(jnp.int32, (tb, nu), 1)
                == uidx_ref[...]).astype(jnp.float32)                  # (TB, Nu)
    user = jnp.dot(u_onehot, utab_ref[...],
                   preferred_element_type=jnp.float32, precision=hi)   # (TB, E)

    # DRR weighted pooling: fold Conv1d weights into a weighted multi-hot over
    # the item table -> gather + conv in ONE MXU matmul; the (M, B, E) gathered
    # intermediate never exists (neither in HBM nor in VMEM).
    iota_i = jax.lax.broadcasted_iota(jnp.int32, (tb, ni), 1)
    m_idx = midx_ref[...]                                              # (TB, M)
    pool = jnp.zeros((tb, ni), jnp.float32)
    for m in range(m_slots):                                           # M small & static
        pool = pool + jnp.where(iota_i == m_idx[:, m:m + 1], convw_ref[m], 0.0)
    drr = jnp.dot(pool, itab_ref[...],
                  preferred_element_type=jnp.float32, precision=hi)    # (TB, E)
    drr = drr + convb_ref[0]

    prod = user * drr                                                  # (TB, E)

    # Linear(3E -> E) on cat[user, user*drr, drr] as three K=E MXU dots
    # (no (TB, 3E) staging scratch, no masked lane-slice stores).
    wt = wt_ref[...]
    out = jnp.dot(user, wt[0:e, :], preferred_element_type=jnp.float32, precision=hi)
    out = out + jnp.dot(prod, wt[e:2 * e, :], preferred_element_type=jnp.float32, precision=hi)
    out = out + jnp.dot(drr, wt[2 * e:3 * e, :], preferred_element_type=jnp.float32, precision=hi)
    out_ref[...] = (out + lb_ref[...]).astype(out_ref.dtype)


def state_repr_forward(user_idx, mem_idx, user_tab, item_tab,
                       conv_w, conv_b, lin_wt, lin_b, tb):
    """user_idx: (Bp, 1) i32; mem_idx: (Bp, M) i32; tables resident; returns (Bp, E)."""
    bp, m_slots = mem_idx.shape
    nu, e = user_tab.shape
    ni = item_tab.shape[0]
    assert bp % tb == 0 and tb % 8 == 0
    n_tiles = bp // tb

    # Explicit VMEM budget (rec for v7x 64 MiB): resident tables + double-
    # buffered per-step blocks + one-hot / intermediate temps, with headroom.
    resident_bytes = 4 * (user_tab.size + item_tab.size + lin_wt.size + lin_b.size)
    step_bytes = 4 * (tb * (m_slots + 1) + tb * e)
    temp_bytes = 4 * tb * (nu + ni + 4 * e)
    vmem_limit = int(min(48 << 20,
                         max(16 << 20,
                             2 * resident_bytes + 4 * step_bytes + 2 * temp_bytes)))

    return pl.pallas_call(
        state_repr_kernel,
        out_shape=jax.ShapeDtypeStruct((bp, e), jnp.float32),
        grid=(n_tiles,),
        in_specs=[
            pl.BlockSpec((tb, 1), lambda i: (i, 0)),            # user indices (per tile)
            pl.BlockSpec((tb, m_slots), lambda i: (i, 0)),      # memory indices (per tile)
            pl.BlockSpec((nu, e), lambda i: (0, 0)),            # user table (resident)
            pl.BlockSpec((ni, e), lambda i: (0, 0)),            # item table (resident)
            pl.BlockSpec(memory_space=pltpu.MemorySpace.SMEM),  # conv weight
            pl.BlockSpec(memory_space=pltpu.MemorySpace.SMEM),  # conv bias
            pl.BlockSpec((3 * e, e), lambda i: (0, 0)),         # linear W^T (resident)
            pl.BlockSpec((1, e), lambda i: (0, 0)),             # linear bias (resident)
        ],
        out_specs=pl.BlockSpec((tb, e), lambda i: (i, 0)),
        compiler_params=pltpu.CompilerParams(
            dimension_semantics=("parallel",),
            vmem_limit_bytes=vmem_limit),
    )(user_idx, mem_idx, user_tab, item_tab, conv_w, conv_b, lin_wt, lin_b)


def state_repr_module(user, memory, params, tile_b=1024):
    """Glue: index padding + table row padding in JAX, everything else in Pallas."""
    user_table, item_table, conv_w, conv_b, lin_wt, lin_b = params
    batch = user.shape[0]

    # Pad table rows to a sublane multiple (padded rows are never selected).
    user_tab = _pad_rows(user_table)
    item_tab = _pad_rows(item_table)
    nu, ni = user_tab.shape[0], item_tab.shape[0]

    # Cap the tile so the in-kernel (tb, Ni) one-hot temp stays under ~4 MiB.
    tile_b = min(tile_b, max(8, ((4 << 20) // (max(nu, ni) * 4)) // 8 * 8))
    tb, bp, _ = _choose_tiling(batch, tile_b)

    pad = bp - batch
    user_idx = jnp.pad(user[:, 0].astype(jnp.int32), (0, pad)).reshape(bp, 1)
    mem_idx = jnp.pad(memory.astype(jnp.int32), ((0, pad), (0, 0)))

    out = state_repr_forward(user_idx, mem_idx, user_tab, item_tab,
                             conv_w, conv_b, lin_wt, lin_b, tb)
    return out[:batch]


def reference_forward(user, memory, params):
    """Pure-JAX reference mirroring the PyTorch module (HIGHEST precision)."""
    user_table, item_table, conv_w, conv_b, lin_wt, lin_b = params
    hi = jax.lax.Precision.HIGHEST
    user_emb = user_table[user[:, 0]]                                       # (B, E)
    item_emb = item_table[memory]                                           # (B, M, E)
    drr = jnp.einsum("bme,m->be", item_emb, conv_w, precision=hi) + conv_b[0]
    feat = jnp.concatenate([user_emb, user_emb * drr, drr], axis=1)         # (B, 3E)
    return jnp.dot(feat, lin_wt, precision=hi) + lin_b[0]                   # (B, E)


def make_params(key, user_num, item_num, embedding_dim, memory_size):
    k1, k2, k3, k4, k5 = jax.random.split(key, 5)
    # nn.init.normal_(user_embeddings.weight, std=0.01)
    user_table = 0.01 * jax.random.normal(k1, (user_num, embedding_dim), jnp.float32)
    # item_embeddings.weight[-1].zero_() is overwritten by the subsequent
    # normal_ init, so the whole table (incl. padding row) is normal.
    item_table = 0.01 * jax.random.normal(k2, (item_num + 1, embedding_dim), jnp.float32)
    # nn.init.uniform_(drr_ave.weight)  (Conv1d weight (1, M, 1) -> flat (M,))
    conv_w = jax.random.uniform(k3, (memory_size,), jnp.float32)
    # drr_ave.bias.zero_()
    conv_b = jnp.zeros((1,), jnp.float32)
    # Linear(3E -> E): pass weight transposed (3E, E) and bias (1, E)
    lin_wt = 0.02 * jax.random.normal(k4, (3 * embedding_dim, embedding_dim), jnp.float32)
    lin_b = 0.02 * jax.random.normal(k5, (1, embedding_dim), jnp.float32)
    return (user_table, item_table, conv_w, conv_b, lin_wt, lin_b)


if __name__ == "__main__":
    user_num, item_num = 10, 20
    embedding_dim, memory_size = 32, 4
    batch = 12  # not a multiple of 8 -> exercises padding and a 2-step grid

    key = jax.random.PRNGKey(0)
    kp, ku, km = jax.random.split(key, 3)
    params = make_params(kp, user_num, item_num, embedding_dim, memory_size)

    user = jax.random.randint(ku, (batch, 1), 0, user_num, jnp.int32)
    # memory may include the padding index `item_num`
    memory = jax.random.randint(km, (batch, memory_size), 0, item_num + 1, jnp.int32)

    out = jax.block_until_ready(state_repr_module(user, memory, params))
    ref = jax.block_until_ready(reference_forward(user, memory, params))

    assert out.shape == (batch, embedding_dim)
    assert jnp.allclose(out, ref, atol=1e-5, rtol=1e-5)
    print("KERNEL_OK")
</pallas_src>

<mosaic_0001>
module attributes {stable_mosaic.version = 11 : i64} {
  func.func @state_repr_kernel(%arg0: i32, %arg1: memref<8x1xi32, #tpu.memory_space<vmem>>, %arg2: memref<8x4xi32, #tpu.memory_space<vmem>>, %arg3: memref<16x32xf32, #tpu.memory_space<vmem>>, %arg4: memref<24x32xf32, #tpu.memory_space<vmem>>, %arg5: memref<4xf32, #tpu.memory_space<smem>>, %arg6: memref<1xf32, #tpu.memory_space<smem>>, %arg7: memref<96x32xf32, #tpu.memory_space<vmem>>, %arg8: memref<1x32xf32, #tpu.memory_space<vmem>>, %arg9: memref<8x32xf32, #tpu.memory_space<vmem>>) attributes {dimension_semantics = [#tpu.dimension_semantics<parallel>], iteration_bounds = array<i64: 2>, scalar_prefetch = 0 : i64, scratch_operands = 0 : i64, tpu.core_type = #tpu.core_type<tc>, window_params = [{transform_indices = @transform_0, window_bounds = array<i64: 8, 1>}, {transform_indices = @transform_1, window_bounds = array<i64: 8, 4>}, {pipeline_mode = #tpu.pipeline_mode<synchronous>, transform_indices = @transform_2, window_bounds = array<i64: 16, 32>}, {pipeline_mode = #tpu.pipeline_mode<synchronous>, transform_indices = @transform_3, window_bounds = array<i64: 24, 32>}, {transform_indices = @transform_4, window_bounds = array<i64: 4>}, {transform_indices = @transform_5, window_bounds = array<i64: 1>}, {pipeline_mode = #tpu.pipeline_mode<synchronous>, transform_indices = @transform_6, window_bounds = array<i64: 96, 32>}, {pipeline_mode = #tpu.pipeline_mode<synchronous>, transform_indices = @transform_7, window_bounds = array<i64: 1, 32>}, {transform_indices = @transform_8, window_bounds = array<i64: 8, 32>}]} {
    %0 = tpu.iota {dimensions = array<i32: 1>} : vector<8x16xi32>
    %c0 = arith.constant 0 : index
    %c0_0 = arith.constant 0 : index
    %1 = vector.load %arg1[%c0, %c0_0] : memref<8x1xi32, #tpu.memory_space<vmem>>, vector<8x1xi32>
    %2 = vector.broadcast %1 : vector<8x1xi32> to vector<8x16xi32>
    %3 = arith.cmpi eq, %0, %2 : vector<8x16xi32>
    %4 = arith.extui %3 : vector<8x16xi1> to vector<8x16xi32>
    %5 = arith.sitofp %4 : vector<8x16xi32> to vector<8x16xf32>
    %c0_1 = arith.constant 0 : index
    %c0_2 = arith.constant 0 : index
    %6 = vector.load %arg3[%c0_1, %c0_2] : memref<16x32xf32, #tpu.memory_space<vmem>>, vector<16x32xf32>
    %cst = arith.constant dense<0.000000e+00> : vector<8x32xf32>
    %7 = tpu.matmul %5, %6, %cst {dimension_numbers = #tpu.dot_dimension_numbers<[1], [0], [0], [1], [0, 0, 1, 1], [], []>, precision = #tpu.contract_precision<fp32>} : vector<8x16xf32>, vector<16x32xf32>, vector<8x32xf32> -> vector<8x32xf32>
    %8 = tpu.iota {dimensions = array<i32: 1>} : vector<8x24xi32>
    %c0_3 = arith.constant 0 : index
    %c0_4 = arith.constant 0 : index
    %9 = vector.load %arg2[%c0_3, %c0_4] : memref<8x4xi32, #tpu.memory_space<vmem>>, vector<8x4xi32>
    %cst_5 = arith.constant 0.000000e+00 : f32
    %10 = vector.broadcast %cst_5 : f32 to vector<8x24xf32>
    %11 = vector.extract_strided_slice %9 {offsets = [0, 0], sizes = [8, 1], strides = [1, 1]} : vector<8x4xi32> to vector<8x1xi32>
    %12 = vector.broadcast %11 : vector<8x1xi32> to vector<8x24xi32>
    %13 = arith.cmpi eq, %8, %12 : vector<8x24xi32>
    %c0_6 = arith.constant 0 : index
    %14 = memref.load %arg5[%c0_6] : memref<4xf32, #tpu.memory_space<smem>>
    %cst_7 = arith.constant 0.000000e+00 : f32
    %15 = vector.broadcast %14 : f32 to vector<8x24xf32>
    %16 = vector.broadcast %cst_7 : f32 to vector<8x24xf32>
    %17 = arith.select %13, %15, %16 : vector<8x24xi1>, vector<8x24xf32>
    %18 = arith.addf %10, %17 : vector<8x24xf32>
    %19 = vector.extract_strided_slice %9 {offsets = [0, 1], sizes = [8, 1], strides = [1, 1]} : vector<8x4xi32> to vector<8x1xi32>
    %20 = vector.broadcast %19 : vector<8x1xi32> to vector<8x24xi32>
    %21 = arith.cmpi eq, %8, %20 : vector<8x24xi32>
    %c1 = arith.constant 1 : index
    %22 = memref.load %arg5[%c1] : memref<4xf32, #tpu.memory_space<smem>>
    %cst_8 = arith.constant 0.000000e+00 : f32
    %23 = vector.broadcast %22 : f32 to vector<8x24xf32>
    %24 = vector.broadcast %cst_8 : f32 to vector<8x24xf32>
    %25 = arith.select %21, %23, %24 : vector<8x24xi1>, vector<8x24xf32>
    %26 = arith.addf %18, %25 : vector<8x24xf32>
    %27 = vector.extract_strided_slice %9 {offsets = [0, 2], sizes = [8, 1], strides = [1, 1]} : vector<8x4xi32> to vector<8x1xi32>
    %28 = vector.broadcast %27 : vector<8x1xi32> to vector<8x24xi32>
    %29 = arith.cmpi eq, %8, %28 : vector<8x24xi32>
    %c2 = arith.constant 2 : index
    %30 = memref.load %arg5[%c2] : memref<4xf32, #tpu.memory_space<smem>>
    %cst_9 = arith.constant 0.000000e+00 : f32
    %31 = vector.broadcast %30 : f32 to vector<8x24xf32>
    %32 = vector.broadcast %cst_9 : f32 to vector<8x24xf32>
    %33 = arith.select %29, %31, %32 : vector<8x24xi1>, vector<8x24xf32>
    %34 = arith.addf %26, %33 : vector<8x24xf32>
    %35 = vector.extract_strided_slice %9 {offsets = [0, 3], sizes = [8, 1], strides = [1, 1]} : vector<8x4xi32> to vector<8x1xi32>
    %36 = vector.broadcast %35 : vector<8x1xi32> to vector<8x24xi32>
    %37 = arith.cmpi eq, %8, %36 : vector<8x24xi32>
    %c3 = arith.constant 3 : index
    %38 = memref.load %arg5[%c3] : memref<4xf32, #tpu.memory_space<smem>>
    %cst_10 = arith.constant 0.000000e+00 : f32
    %39 = vector.broadcast %38 : f32 to vector<8x24xf32>
    %40 = vector.broadcast %cst_10 : f32 to vector<8x24xf32>
    %41 = arith.select %37, %39, %40 : vector<8x24xi1>, vector<8x24xf32>
    %42 = arith.addf %34, %41 : vector<8x24xf32>
    %c0_11 = arith.constant 0 : index
    %c0_12 = arith.constant 0 : index
    %43 = vector.load %arg4[%c0_11, %c0_12] : memref<24x32xf32, #tpu.memory_space<vmem>>, vector<24x32xf32>
    %cst_13 = arith.constant dense<0.000000e+00> : vector<8x32xf32>
    %44 = tpu.matmul %42, %43, %cst_13 {dimension_numbers = #tpu.dot_dimension_numbers<[1], [0], [0], [1], [0, 0, 1, 1], [], []>, precision = #tpu.contract_precision<fp32>} : vector<8x24xf32>, vector<24x32xf32>, vector<8x32xf32> -> vector<8x32xf32>
    %c0_14 = arith.constant 0 : index
    %45 = memref.load %arg6[%c0_14] : memref<1xf32, #tpu.memory_space<smem>>
    %46 = vector.broadcast %45 : f32 to vector<8x32xf32>
    %47 = arith.addf %44, %46 : vector<8x32xf32>
    %48 = arith.mulf %7, %47 : vector<8x32xf32>
    %c0_15 = arith.constant 0 : index
    %c0_16 = arith.constant 0 : index
    %49 = vector.load %arg7[%c0_15, %c0_16] : memref<96x32xf32, #tpu.memory_space<vmem>>, vector<96x32xf32>
    %50 = vector.extract_strided_slice %49 {offsets = [0, 0], sizes = [32, 32], strides = [1, 1]} : vector<96x32xf32> to vector<32x32xf32>
    %cst_17 = arith.constant dense<0.000000e+00> : vector<8x32xf32>
    %51 = tpu.matmul %7, %50, %cst_17 {dimension_numbers = #tpu.dot_dimension_numbers<[1], [0], [0], [1], [0, 0, 1, 1], [], []>, precision = #tpu.contract_precision<fp32>} : vector<8x32xf32>, vector<32x32xf32>, vector<8x32xf32> -> vector<8x32xf32>
    %52 = vector.extract_strided_slice %49 {offsets = [32, 0], sizes = [32, 32], strides = [1, 1]} : vector<96x32xf32> to vector<32x32xf32>
    %cst_18 = arith.constant dense<0.000000e+00> : vector<8x32xf32>
    %53 = tpu.matmul %48, %52, %cst_18 {dimension_numbers = #tpu.dot_dimension_numbers<[1], [0], [0], [1], [0, 0, 1, 1], [], []>, precision = #tpu.contract_precision<fp32>} : vector<8x32xf32>, vector<32x32xf32>, vector<8x32xf32> -> vector<8x32xf32>
    %54 = arith.addf %51, %53 : vector<8x32xf32>
    %55 = vector.extract_strided_slice %49 {offsets = [64, 0], sizes = [32, 32], strides = [1, 1]} : vector<96x32xf32> to vector<32x32xf32>
    %cst_19 = arith.constant dense<0.000000e+00> : vector<8x32xf32>
    %56 = tpu.matmul %47, %55, %cst_19 {dimension_numbers = #tpu.dot_dimension_numbers<[1], [0], [0], [1], [0, 0, 1, 1], [], []>, precision = #tpu.contract_precision<fp32>} : vector<8x32xf32>, vector<32x32xf32>, vector<8x32xf32> -> vector<8x32xf32>
    %57 = arith.addf %54, %56 : vector<8x32xf32>
    %c0_20 = arith.constant 0 : index
    %c0_21 = arith.constant 0 : index
    %58 = vector.load %arg8[%c0_20, %c0_21] : memref<1x32xf32, #tpu.memory_space<vmem>>, vector<1x32xf32>
    %59 = vector.broadcast %58 : vector<1x32xf32> to vector<8x32xf32>
    %60 = arith.addf %57, %59 : vector<8x32xf32>
    %c0_22 = arith.constant 0 : index
    %c0_23 = arith.constant 0 : index
    %61 = vector.load %arg9[%c0_22, %c0_23] : memref<8x32xf32, #tpu.memory_space<vmem>>, vector<8x32xf32>
    tpu.vector_store %arg9[%c0_22, %c0_23], %60 {strides = array<i32>} : memref<8x32xf32, #tpu.memory_space<vmem>>, vector<8x32xf32>,
    return
  }
  func.func @transform_0(%arg0: i32) -> (i32, i32) {
    %c0_i32 = arith.constant 0 : i32
    %c0_i32_0 = arith.constant 0 : i32
    return %arg0, %c0_i32 : i32, i32
  }
  func.func @transform_1(%arg0: i32) -> (i32, i32) {
    %c0_i32 = arith.constant 0 : i32
    %c0_i32_0 = arith.constant 0 : i32
    return %arg0, %c0_i32 : i32, i32
  }
  func.func @transform_2(%arg0: i32) -> (i32, i32) {
    %c0_i32 = arith.constant 0 : i32
    %c0_i32_0 = arith.constant 0 : i32
    %c0_i32_1 = arith.constant 0 : i32
    return %c0_i32, %c0_i32_0 : i32, i32
  }
  func.func @transform_3(%arg0: i32) -> (i32, i32) {
    %c0_i32 = arith.constant 0 : i32
    %c0_i32_0 = arith.constant 0 : i32
    %c0_i32_1 = arith.constant 0 : i32
    return %c0_i32, %c0_i32_0 : i32, i32
  }
  func.func @transform_4(%arg0: i32) -> i32 {
    %c0_i32 = arith.constant 0 : i32
    %c0_i32_0 = arith.constant 0 : i32
    return %c0_i32 : i32
  }
  func.func @transform_5(%arg0: i32) -> i32 {
    %c0_i32 = arith.constant 0 : i32
    %c0_i32_0 = arith.constant 0 : i32
    return %c0_i32 : i32
  }
  func.func @transform_6(%arg0: i32) -> (i32, i32) {
    %c0_i32 = arith.constant 0 : i32
    %c0_i32_0 = arith.constant 0 : i32
    %c0_i32_1 = arith.constant 0 : i32
    return %c0_i32, %c0_i32_0 : i32, i32
  }
  func.func @transform_7(%arg0: i32) -> (i32, i32) {
    %c0_i32 = arith.constant 0 : i32
    %c0_i32_0 = arith.constant 0 : i32
    %c0_i32_1 = arith.constant 0 : i32
    return %c0_i32, %c0_i32_0 : i32, i32
  }
  func.func @transform_8(%arg0: i32) -> (i32, i32) {
    %c0_i32 = arith.constant 0 : i32
    %c0_i32_0 = arith.constant 0 : i32
    return %arg0, %c0_i32 : i32, i32
  }
}

</mosaic_0001>

<llo_original>
// kernel: tpu_custom_call.1
$region0: #{tpu_custom_call.1}
  #allocation0 [shape = 'u32[]', space=smem, size = 0x4, offset = 0x4, fixed_abs, tag = 'smem constant byte address 0x4 - core index']
  #allocation1 [shape = 'u32[72,128]{1,0:T(1,128)}', space=vmem, size = 0x9000, scoped, tag = 'internal scratch']
  #allocation2 [shape = 'f32[1]{0:T(128)S(6)}', space=smem, size = 0x200, scoped, tag = 'scoped memory for tpu_custom_call.1']
  %s0 = inlined_call_operand.vmem [shape: s32[16,1], index: 0, kind: input, shape index: {}]
  %s1 = inlined_call_operand.vmem [shape: s32[16,4], index: 1, kind: input, shape index: {}]
  %s2 = inlined_call_operand.vmem [shape: f32[16,32], index: 2, kind: input, shape index: {}]
  %s3 = inlined_call_operand.vmem [shape: f32[24,32], index: 3, kind: input, shape index: {}]
  %s4 = inlined_call_operand.vmem [shape: f32[4], index: 4, kind: input, shape index: {}]
  %s5 = inlined_call_operand.<no memory space> [shape: f32[1], index: 5, kind: input, shape index: {}]
  %s6 = inlined_call_operand.vmem [shape: f32[96,32], index: 6, kind: input, shape index: {}]
  %s7 = inlined_call_operand.vmem [shape: f32[1,32], index: 7, kind: input, shape index: {}]
  %s8 = inlined_call_operand.hbm [shape: f32[16,32], index: 8, kind: output, shape index: {}]
  %s9 = sld [smem:[#allocation0]]
  $region69: #{tpu_custom_call.1} parent=0
    _
  %s11 = ssub.s32 1, %s9
  %s12 = scalar_select 0, %s11, %s9
  %13 = sst [smem:[#allocation2]] %s5
  $region1: #{tpu_custom_call.1} parent=0
    #allocation3 [shape = 'u8[512]{0}', space=smem, size = 0x200, scoped, tag = 'input window, operand 4, single buffered']
    #allocation4 [shape = 's32[2]{0}', space=sflag, size = 0x8, scoped, tag = 'scoped memory for tpu_custom_call.1']
    #allocation5 [shape = 's32[2]{0}', space=sflag, size = 0x8, scoped, tag = 'scoped memory for tpu_custom_call.1']
    #allocation6 [shape = 'u8[8192]{0}', space=vmem, size = 0x2000, scoped, tag = 'output window, operand 0']
    %14 = vsyncpa [#allocation5], 0
    %15 = vsyncpa [#allocation4], 0
    %s16 = scalar_lea.sflag [#allocation4], 1
    %17 = vsyncpa %s16, 0
    loop: start=0, step=1, limit=4
    $region2: #{tpu_custom_call.1} parent=1 // loop_pre_header
      _
    $region3: #{tpu_custom_call.1} parent=1 // loop_header
      %s19 = sphi 0, %s23
      %p20 = scmp.ge.s32.totalorder %s19, 4
      %s29 = sphi 0, %s31
      %s32 = sphi 0, %s29
      %s33 = sphi 0, %s32
      %s49 = sphi 0, %s33
      %s55 = sphi 0, %s57
      %s58 = sphi 0, %s55
      %s59 = sphi 0, %s58
      %s75 = sphi 0, %s59
      %s79 = sphi 0, %s79
      %s81 = sphi 0, %s79
      %s82 = sphi 0, %s81
      %s96 = sphi 0, %s82
      %s100 = sphi 0, %s100
      %s102 = sphi 0, %s100
      %s103 = sphi 0, %s102
      %s117 = sphi 0, %s103
      %s121 = sphi 0, %s121
      %s123 = sphi 0, %s121
      %s124 = sphi 0, %s123
      %s138 = sphi 0, %s124
      %s142 = sphi 0, %s142
      %s144 = sphi 0, %s142
      %s145 = sphi 0, %s144
      %s159 = sphi 0, %s145
      %s163 = sphi 0, %s163
      %s165 = sphi 0, %s163
      %s166 = sphi 0, %s165
      %s180 = sphi 0, %s166
      %s184 = sphi 0, %s184
      %s186 = sphi 0, %s184
      %s187 = sphi 0, %s186
      %s201 = sphi 0, %s187
      %s207 = sphi 0, %s209
      %s210 = sphi 0, %s207
      %s211 = sphi 0, %s210
      %s227 = sphi 0, %s211
    $region4: #{tpu_custom_call.1} parent=1 // loop_header_branch
      %22 = sbr.rel (%p20) target = $region8
    $region5: #{tpu_custom_call.1} parent=1 // loop_body
      %s24 = ssub.s32 %s19, 1
      %s25 = ssub.s32 %s19, 2
      %s26 = sadd.s32 %s19, 1
      %s27 = ssub.s32 %s19, %s26
      %p28 = scmp.eq.s32.totalorder %s27, 0
      %s30 = sadd.s32 %s29, 1
      %s31 = scalar_select %p28, %s29, %s30
      %p34 = pneg %p28
      %p35 = scmp.eq.s32.totalorder %s19, 1
      %p36 = por %p34, %p35
      %p37 = scmp.ne.s32.totalorder %s29, %s32
      %p38 = scmp.eq.s32.totalorder %s19, 0
      %p39 = por %p37, %p38
      %p40 = scmp.ne.s32.totalorder %s29, %s32
      %p41 = scmp.eq.s32.totalorder %s24, 1
      %p42 = por %p40, %p41
      %p43 = scmp.ne.s32.totalorder %s32, %s33
      %p44 = scmp.eq.s32.totalorder %s24, 0
      %p45 = por %p43, %p44
      %p46 = scmp.ne.s32.totalorder %s32, %s33
      %p47 = scmp.eq.s32.totalorder %s25, 1
      %p48 = por %p46, %p47
      %p50 = scmp.ne.s32.totalorder %s33, %s49
      %p51 = scmp.eq.s32.totalorder %s25, 0
      %p52 = por %p50, %p51
      %s53 = ssub.s32 %s19, %s26
      %p54 = scmp.eq.s32.totalorder %s53, 0
      %s56 = sadd.s32 %s55, 1
      %s57 = scalar_select %p54, %s55, %s56
      %p60 = pneg %p54
      %p61 = scmp.eq.s32.totalorder %s19, 1
      %p62 = por %p60, %p61
      %p63 = scmp.ne.s32.totalorder %s55, %s58
      %p64 = scmp.eq.s32.totalorder %s19, 0
      %p65 = por %p63, %p64
      %p66 = scmp.ne.s32.totalorder %s55, %s58
      %p67 = scmp.eq.s32.totalorder %s24, 1
      %p68 = por %p66, %p67
      %p69 = scmp.ne.s32.totalorder %s58, %s59
      %p70 = scmp.eq.s32.totalorder %s24, 0
      %p71 = por %p69, %p70
      %p72 = scmp.ne.s32.totalorder %s58, %s59
      %p73 = scmp.eq.s32.totalorder %s25, 1
      %p74 = por %p72, %p73
      %p76 = scmp.ne.s32.totalorder %s59, %s75
      %p77 = scmp.eq.s32.totalorder %s25, 0
      %p78 = por %p76, %p77
      %s80 = sadd.s32 %s79, 1
      %p83 = scmp.eq.s32.totalorder %s19, 1
      %p84 = scmp.ne.s32.totalorder %s79, %s81
      %p85 = scmp.eq.s32.totalorder %s19, 0
      %p86 = por %p84, %p85
      %p87 = scmp.ne.s32.totalorder %s79, %s81
      %p88 = scmp.eq.s32.totalorder %s24, 1
      %p89 = por %p87, %p88
      %p90 = scmp.ne.s32.totalorder %s81, %s82
      %p91 = scmp.eq.s32.totalorder %s24, 0
      %p92 = por %p90, %p91
      %p93 = scmp.ne.s32.totalorder %s81, %s82
      %p94 = scmp.eq.s32.totalorder %s25, 1
      %p95 = por %p93, %p94
      %p97 = scmp.ne.s32.totalorder %s82, %s96
      %p98 = scmp.eq.s32.totalorder %s25, 0
      %p99 = por %p97, %p98
      %s101 = sadd.s32 %s100, 1
      %p104 = scmp.eq.s32.totalorder %s19, 1
      %p105 = scmp.ne.s32.totalorder %s100, %s102
      %p106 = scmp.eq.s32.totalorder %s19, 0
      %p107 = por %p105, %p106
      %p108 = scmp.ne.s32.totalorder %s100, %s102
      %p109 = scmp.eq.s32.totalorder %s24, 1
      %p110 = por %p108, %p109
      %p111 = scmp.ne.s32.totalorder %s102, %s103
      %p112 = scmp.eq.s32.totalorder %s24, 0
      %p113 = por %p111, %p112
      %p114 = scmp.ne.s32.totalorder %s102, %s103
      %p115 = scmp.eq.s32.totalorder %s25, 1
      %p116 = por %p114, %p115
      %p118 = scmp.ne.s32.totalorder %s103, %s117
      %p119 = scmp.eq.s32.totalorder %s25, 0
      %p120 = por %p118, %p119
      %s122 = sadd.s32 %s121, 1
      %p125 = scmp.eq.s32.totalorder %s19, 1
      %p126 = scmp.ne.s32.totalorder %s121, %s123
      %p127 = scmp.eq.s32.totalorder %s19, 0
      %p128 = por %p126, %p127
      %p129 = scmp.ne.s32.totalorder %s121, %s123
      %p130 = scmp.eq.s32.totalorder %s24, 1
      %p131 = por %p129, %p130
      %p132 = scmp.ne.s32.totalorder %s123, %s124
      %p133 = scmp.eq.s32.totalorder %s24, 0
      %p134 = por %p132, %p133
      %p135 = scmp.ne.s32.totalorder %s123, %s124
      %p136 = scmp.eq.s32.totalorder %s25, 1
      %p137 = por %p135, %p136
      %p139 = scmp.ne.s32.totalorder %s124, %s138
      %p140 = scmp.eq.s32.totalorder %s25, 0
      %p141 = por %p139, %p140
      %s143 = sadd.s32 %s142, 1
      %p146 = scmp.eq.s32.totalorder %s19, 1
      %p147 = scmp.ne.s32.totalorder %s142, %s144
      %p148 = scmp.eq.s32.totalorder %s19, 0
      %p149 = por %p147, %p148
      %p150 = scmp.ne.s32.totalorder %s142, %s144
      %p151 = scmp.eq.s32.totalorder %s24, 1
      %p152 = por %p150, %p151
      %p153 = scmp.ne.s32.totalorder %s144, %s145
      %p154 = scmp.eq.s32.totalorder %s24, 0
      %p155 = por %p153, %p154
      %p156 = scmp.ne.s32.totalorder %s144, %s145
      %p157 = scmp.eq.s32.totalorder %s25, 1
      %p158 = por %p156, %p157
      %p160 = scmp.ne.s32.totalorder %s145, %s159
      %p161 = scmp.eq.s32.totalorder %s25, 0
      %p162 = por %p160, %p161
      %s164 = sadd.s32 %s163, 1
      %p167 = scmp.eq.s32.totalorder %s19, 1
      %p168 = scmp.ne.s32.totalorder %s163, %s165
      %p169 = scmp.eq.s32.totalorder %s19, 0
      %p170 = por %p168, %p169
      %p171 = scmp.ne.s32.totalorder %s163, %s165
      %p172 = scmp.eq.s32.totalorder %s24, 1
      %p173 = por %p171, %p172
      %p174 = scmp.ne.s32.totalorder %s165, %s166
      %p175 = scmp.eq.s32.totalorder %s24, 0
      %p176 = por %p174, %p175
      %p177 = scmp.ne.s32.totalorder %s165, %s166
      %p178 = scmp.eq.s32.totalorder %s25, 1
      %p179 = por %p177, %p178
      %p181 = scmp.ne.s32.totalorder %s166, %s180
      %p182 = scmp.eq.s32.totalorder %s25, 0
      %p183 = por %p181, %p182
      %s185 = sadd.s32 %s184, 1
      %p188 = scmp.eq.s32.totalorder %s19, 1
      %p189 = scmp.ne.s32.totalorder %s184, %s186
      %p190 = scmp.eq.s32.totalorder %s19, 0
      %p191 = por %p189, %p190
      %p192 = scmp.ne.s32.totalorder %s184, %s186
      %p193 = scmp.eq.s32.totalorder %s24, 1
      %p194 = por %p192, %p193
      %p195 = scmp.ne.s32.totalorder %s186, %s187
      %p196 = scmp.eq.s32.totalorder %s24, 0
      %p197 = por %p195, %p196
      %p198 = scmp.ne.s32.totalorder %s186, %s187
      %p199 = scmp.eq.s32.totalorder %s25, 1
      %p200 = por %p198, %p199
      %p202 = scmp.ne.s32.totalorder %s187, %s201
      %p203 = scmp.eq.s32.totalorder %s25, 0
      %p204 = por %p202, %p203
      %s205 = ssub.s32 %s19, %s26
      %p206 = scmp.eq.s32.totalorder %s205, 0
      %s208 = sadd.s32 %s207, 1
      %s209 = scalar_select %p206, %s207, %s208
      %p212 = pneg %p206
      %p213 = scmp.eq.s32.totalorder %s19, 1
      %p214 = por %p212, %p213
      %p215 = scmp.ne.s32.totalorder %s207, %s210
      %p216 = scmp.eq.s32.totalorder %s19, 0
      %p217 = por %p215, %p216
      %p218 = scmp.ne.s32.totalorder %s207, %s210
      %p219 = scmp.eq.s32.totalorder %s24, 1
      %p220 = por %p218, %p219
      %p221 = scmp.ne.s32.totalorder %s210, %s211
      %p222 = scmp.eq.s32.totalorder %s24, 0
      %p223 = por %p221, %p222
      %p224 = scmp.ne.s32.totalorder %s210, %s211
      %p225 = scmp.eq.s32.totalorder %s25, 1
      %p226 = por %p224, %p225
      %p228 = scmp.ne.s32.totalorder %s211, %s227
      %p229 = scmp.eq.s32.totalorder %s25, 0
      %p230 = por %p228, %p229
      %p231 = scmp.le.s32.totalorder 1, %s19
      %p232 = scmp.lt.s32.totalorder %s19, 3
      %p233 = pnand %p231, %p232
      %p234 = pneg %p233
      // Predicated region
      $region9: #{tpu_custom_call.1} parent=5 // pred_check
        _
      $region10: #{tpu_custom_call.1} parent=5 // pred_check_branch
        %236 = sbr.rel (%p233) target = $region12
      $region11: #{tpu_custom_call.1} parent=5 // pred_region
        %s237 = ssub.s32 %s19, 1
        // Predicated region
        $region13: #{tpu_custom_call.1} parent=11 // pred_check
          %p238 = pneg %p92
        $region14: #{tpu_custom_call.1} parent=11 // pred_check_branch
          %240 = sbr.rel (%p238) target = $region16
        $region15: #{tpu_custom_call.1} parent=11 // pred_region
          _
        $region16: #{tpu_custom_call.1} parent=11 // pred_fallthru
          _
        // Predicated region
        $region17: #{tpu_custom_call.1} parent=11 // pred_check
          %p241 = pneg %p113
        $region18: #{tpu_custom_call.1} parent=11 // pred_check_branch
          %243 = sbr.rel (%p241) target = $region20
        $region19: #{tpu_custom_call.1} parent=11 // pred_region
          _
        $region20: #{tpu_custom_call.1} parent=11 // pred_fallthru
          _
        // Predicated region
        $region21: #{tpu_custom_call.1} parent=11 // pred_check
          %p244 = pneg %p134
        $region22: #{tpu_custom_call.1} parent=11 // pred_check_branch
          %246 = sbr.rel (%p244) target = $region24
        $region23: #{tpu_custom_call.1} parent=11 // pred_region
          %248 = vsyncadd [#allocation5], 0
          %s250 = sshll.u32 %s4, 4
          %s251 = int_to_ptr.vmem [resolvable:$true] %s250
          %253 = dma.vmem_to_smem %s251, 16, [#allocation3], [#allocation5]
        $region24: #{tpu_custom_call.1} parent=11 // pred_fallthru
          _
        // Predicated region
        $region25: #{tpu_custom_call.1} parent=11 // pred_check
          %p254 = pneg %p155
        $region26: #{tpu_custom_call.1} parent=11 // pred_check_branch
          %256 = sbr.rel (%p254) target = $region28
        $region27: #{tpu_custom_call.1} parent=11 // pred_region
          _
        $region28: #{tpu_custom_call.1} parent=11 // pred_fallthru
          _
        // Predicated region
        $region29: #{tpu_custom_call.1} parent=11 // pred_check
          %p257 = pneg %p176
        $region30: #{tpu_custom_call.1} parent=11 // pred_check_branch
          %259 = sbr.rel (%p257) target = $region32
        $region31: #{tpu_custom_call.1} parent=11 // pred_region
          _
        $region32: #{tpu_custom_call.1} parent=11 // pred_fallthru
          _
        // Predicated region
        $region33: #{tpu_custom_call.1} parent=11 // pred_check
          %p260 = pneg %p197
        $region34: #{tpu_custom_call.1} parent=11 // pred_check_branch
          %262 = sbr.rel (%p260) target = $region36
        $region35: #{tpu_custom_call.1} parent=11 // pred_region
          _
        $region36: #{tpu_custom_call.1} parent=11 // pred_fallthru
          _
      $region12: #{tpu_custom_call.1} parent=5 // pred_fallthru
        _
      %p263 = scmp.lt.s32.totalorder %s19, 2
      // Predicated region
      $region37: #{tpu_custom_call.1} parent=5 // pred_check
        %p264 = pneg %p263
      $region38: #{tpu_custom_call.1} parent=5 // pred_check_branch
        %266 = sbr.rel (%p264) target = $region40
      $region39: #{tpu_custom_call.1} parent=5 // pred_region
        // Predicated region
        $region41: #{tpu_custom_call.1} parent=39 // pred_check
          %p267 = pneg %p39
        $region42: #{tpu_custom_call.1} parent=39 // pred_check_branch
          %269 = sbr.rel (%p267) target = $region44
        $region43: #{tpu_custom_call.1} parent=39 // pred_region
          %p270 = scmp.lt.s32.totalorder %s19, 1
          %s271 = scalar_select %p270, %s19, 1
          %s272 = smul.addr %s271, 8
          %s273 = scalar_lea.vmem %s0, %s272
        $region44: #{tpu_custom_call.1} parent=39 // pred_fallthru
          _
        // Predicated region
        $region45: #{tpu_custom_call.1} parent=39 // pred_check
          %p274 = pneg %p65
        $region46: #{tpu_custom_call.1} parent=39 // pred_check_branch
          %276 = sbr.rel (%p274) target = $region48
        $region47: #{tpu_custom_call.1} parent=39 // pred_region
          %p277 = scmp.lt.s32.totalorder %s19, 1
          %s278 = scalar_select %p277, %s19, 1
          %s279 = smul.addr %s278, 8
          %s280 = scalar_lea.vmem %s1, %s279
        $region48: #{tpu_custom_call.1} parent=39 // pred_fallthru
          _
      $region40: #{tpu_custom_call.1} parent=5 // pred_fallthru
        _
      %p281 = scmp.le.s32.totalorder 1, %s19
      %p282 = scmp.lt.s32.totalorder %s19, 3
      %p283 = pnand %p281, %p282
      %p284 = pneg %p283
      // Predicated region
      $region49: #{tpu_custom_call.1} parent=5 // pred_check
        _
      $region50: #{tpu_custom_call.1} parent=5 // pred_check_branch
        %286 = sbr.rel (%p283) target = $region52
      $region51: #{tpu_custom_call.1} parent=5 // pred_region
        %s287 = ssub.s32 %s19, 1
        // Predicated region
        $region53: #{tpu_custom_call.1} parent=51 // pred_check
          %p288 = pneg %p134
        $region54: #{tpu_custom_call.1} parent=51 // pred_check_branch
          %290 = sbr.rel (%p288) target = $region56
        $region55: #{tpu_custom_call.1} parent=51 // pred_region
          %292 = dma.done [#allocation5], 16
        $region56: #{tpu_custom_call.1} parent=51 // pred_fallthru
          _
        %293 = sfence
        %p294 = scmp.lt.s32.totalorder %s24, 1
        %s295 = scalar_select %p294, %s24, 1
        %s296 = smul.addr %s295, 8
        %s297 = scalar_lea.vmem %s0, %s296
        %p298 = pneg %p45
        %p299 = pneg %p42
        %p300 = scmp.lt.s32.totalorder %s24, 1
        %s301 = scalar_select %p300, %s24, 1
        %s302 = smul.addr %s301, 8
        %s303 = scalar_lea.vmem %s1, %s302
        %p304 = pneg %p71
        %p305 = pneg %p68
        %p306 = pneg %p92
        %p307 = pneg %p89
        %p308 = pneg %p113
        %p309 = pneg %p110
        %p310 = pneg %p134
        %p311 = pneg %p131
        %p312 = pneg %p155
        %p313 = pneg %p152
        %p314 = pneg %p176
        %p315 = pneg %p173
        %p316 = pneg %p197
        %p317 = pneg %p194
        %p318 = pneg %p223
        %p319 = pneg %p220
        %s320 = sand.u32 %s210, 1
        %s321 = scalar_lea.sflag [#allocation4], %s320
        %s322 = sand.u32 %s210, 1
        %s323 = smul.addr %s322, 8
        %s324 = scalar_lea.vmem [#allocation6], %s323
        %p325 = scmp.lt.s32.totalorder %s24, 1
        %s326 = scalar_select %p325, %s24, 1
        %s327 = smul.addr %s326, 8
        %s328 = scalar_lea.vmem %s0, %s327
        %p329 = scmp.lt.s32.totalorder %s24, 1
        %s330 = scalar_select %p329, %s24, 1
        %s331 = smul.addr %s330, 8
        %s332 = scalar_lea.vmem %s1, %s331
        %v333 = vlaneseq
        %v334 = vand.u32 %v333, 127
        %v335 = vld [vmem:[%s328] sm:$0xff]
        %336 = vset.pattern.permute.xlu0 0
        %337 = vperm.xlu0 %336, %v335
        %v338 = vpop.permute.xlu0 %337
        %vm339 = vcmp.eq.s32.totalorder %v334, %v338
        %v340 = vsel %vm339, 1, 0
        %v341 = vcvt.s32.f32 %v340
        %v342 = vld [vmem:[%s2] sm:$0xff]
        %v343 = vld [vmem:[%s2 + $0x8] sm:$0xff]
        %vm344 = vcmask 130048
        %v346 = vsel %vm344, %v341, 0
        %348 = vmatpush.msra.mxu0 0.0
        %349 = vmatpush.msra.mxu0 0.0
        %350 = vmatpush.msra.mxu0 0.0
        %351 = vmatpush.msra.mxu0 0.0
        %352 = vmatpush.msra.mxu0 0.0
        %353 = vmatpush.msra.mxu0 0.0
        %354 = vmatpush.msra.mxu0 0.0
        %355 = vmatpush.msra.mxu0 0.0
        %356 = vmatpush.msra.mxu0 0.0
        %357 = vmatpush.msra.mxu0 0.0
        %358 = vmatpush.msra.mxu0 0.0
        %359 = vmatpush.msra.mxu0 0.0
        %360 = vmatpush.msra.mxu0 0.0
        %361 = vmatpush.msra.mxu0 0.0
        %v362 = vand.u32 %v343, 4294901760
        %363 = vmatpush.msra.mxu0 %v362
        %v364 = vand.u32 %v342, 4294901760
        %365 = vmatpush.msra.mxu0 %v364
        %v366 = vand.u32 %v346, 4294901760
        %v367 = vsub.f32 %v346, %v366
        %v368 = vand.u32 %v367, 4294901760
        %v369 = vsub.f32 %v367, %v368
        %v370 = vand.u32 %v369, 4294901760
        %371 = vmatmul.f32.gmra.mxu0 %v370
        %v372 = vpop.f32.mrf.mxu0
        %v373 = vadd.f32 0.0, %v372
        %374 = vdwg.mxu0
        %375 = vmatpush.msra.mxu0 0.0
        %376 = vmatpush.msra.mxu0 0.0
        %377 = vmatpush.msra.mxu0 0.0
        %378 = vmatpush.msra.mxu0 0.0
        %379 = vmatpush.msra.mxu0 0.0
        %380 = vmatpush.msra.mxu0 0.0
        %381 = vmatpush.msra.mxu0 0.0
        %382 = vmatpush.msra.mxu0 0.0
        %383 = vmatpush.msra.mxu0 0.0
        %384 = vmatpush.msra.mxu0 0.0
        %385 = vmatpush.msra.mxu0 0.0
        %386 = vmatpush.msra.mxu0 0.0
        %387 = vmatpush.msra.mxu0 0.0
        %388 = vmatpush.msra.mxu0 0.0
        %v389 = vand.u32 %v343, 4294901760
        %v390 = vsub.f32 %v343, %v389
        %v391 = vand.u32 %v390, 4294901760
        %v392 = vsub.f32 %v390, %v391
        %v393 = vand.u32 %v392, 4294901760
        %394 = vmatpush.msra.mxu0 %v393
        %v395 = vand.u32 %v342, 4294901760
        %v396 = vsub.f32 %v342, %v395
        %v397 = vand.u32 %v396, 4294901760
        %v398 = vsub.f32 %v396, %v397
        %v399 = vand.u32 %v398, 4294901760
        %400 = vmatpush.msra.mxu0 %v399
        %v401 = vand.u32 %v346, 4294901760
        %402 = vmatmul.f32.gmra.mxu0 %v401
        %v403 = vpop.f32.mrf.mxu0
        %v404 = vadd.f32 %v373, %v403
        %405 = vdwg.mxu0
        %406 = vmatpush.msra.mxu0 0.0
        %407 = vmatpush.msra.mxu0 0.0
        %408 = vmatpush.msra.mxu0 0.0
        %409 = vmatpush.msra.mxu0 0.0
        %410 = vmatpush.msra.mxu0 0.0
        %411 = vmatpush.msra.mxu0 0.0
        %412 = vmatpush.msra.mxu0 0.0
        %413 = vmatpush.msra.mxu0 0.0
        %414 = vmatpush.msra.mxu0 0.0
        %415 = vmatpush.msra.mxu0 0.0
        %416 = vmatpush.msra.mxu0 0.0
        %417 = vmatpush.msra.mxu0 0.0
        %418 = vmatpush.msra.mxu0 0.0
        %419 = vmatpush.msra.mxu0 0.0
        %v420 = vand.u32 %v343, 4294901760
        %v421 = vsub.f32 %v343, %v420
        %422 = vmatpush.msra.mxu0 %v421
        %v423 = vand.u32 %v342, 4294901760
        %v424 = vsub.f32 %v342, %v423
        %425 = vmatpush.msra.mxu0 %v424
        %v426 = vand.u32 %v346, 4294901760
        %v427 = vsub.f32 %v346, %v426
        %428 = vmatmul.f32.gmra.mxu0 %v427
        %v429 = vpop.f32.mrf.mxu0
        %v430 = vadd.f32 %v404, %v429
        %431 = vdwg.mxu0
        %432 = vmatpush.msra.mxu0 0.0
        %433 = vmatpush.msra.mxu0 0.0
        %434 = vmatpush.msra.mxu0 0.0
        %435 = vmatpush.msra.mxu0 0.0
        %436 = vmatpush.msra.mxu0 0.0
        %437 = vmatpush.msra.mxu0 0.0
        %438 = vmatpush.msra.mxu0 0.0
        %439 = vmatpush.msra.mxu0 0.0
        %440 = vmatpush.msra.mxu0 0.0
        %441 = vmatpush.msra.mxu0 0.0
        %442 = vmatpush.msra.mxu0 0.0
        %443 = vmatpush.msra.mxu0 0.0
        %444 = vmatpush.msra.mxu0 0.0
        %445 = vmatpush.msra.mxu0 0.0
        %v446 = vand.u32 %v343, 4294901760
        %447 = vmatpush.msra.mxu0 %v446
        %v448 = vand.u32 %v342, 4294901760
        %449 = vmatpush.msra.mxu0 %v448
        %v450 = vand.u32 %v346, 4294901760
        %v451 = vsub.f32 %v346, %v450
        %v452 = vand.u32 %v451, 4294901760
        %453 = vmatmul.f32.gmra.mxu0 %v452
        %v454 = vpop.f32.mrf.mxu0
        %v455 = vadd.f32 %v430, %v454
        %456 = vdwg.mxu0
        %457 = vmatpush.msra.mxu0 0.0
        %458 = vmatpush.msra.mxu0 0.0
        %459 = vmatpush.msra.mxu0 0.0
        %460 = vmatpush.msra.mxu0 0.0
        %461 = vmatpush.msra.mxu0 0.0
        %462 = vmatpush.msra.mxu0 0.0
        %463 = vmatpush.msra.mxu0 0.0
        %464 = vmatpush.msra.mxu0 0.0
        %465 = vmatpush.msra.mxu0 0.0
        %466 = vmatpush.msra.mxu0 0.0
        %467 = vmatpush.msra.mxu0 0.0
        %468 = vmatpush.msra.mxu0 0.0
        %469 = vmatpush.msra.mxu0 0.0
        %470 = vmatpush.msra.mxu0 0.0
        %v471 = vand.u32 %v343, 4294901760
        %v472 = vsub.f32 %v343, %v471
        %v473 = vand.u32 %v472, 4294901760
        %474 = vmatpush.msra.mxu0 %v473
        %v475 = vand.u32 %v342, 4294901760
        %v476 = vsub.f32 %v342, %v475
        %v477 = vand.u32 %v476, 4294901760
        %478 = vmatpush.msra.mxu0 %v477
        %v479 = vand.u32 %v346, 4294901760
        %480 = vmatmul.f32.gmra.mxu0 %v479
        %v481 = vpop.f32.mrf.mxu0
        %v482 = vadd.f32 %v455, %v481
        %483 = vdwg.mxu0
        %484 = vmatpush.msra.mxu0 0.0
        %485 = vmatpush.msra.mxu0 0.0
        %486 = vmatpush.msra.mxu0 0.0
        %487 = vmatpush.msra.mxu0 0.0
        %488 = vmatpush.msra.mxu0 0.0
        %489 = vmatpush.msra.mxu0 0.0
        %490 = vmatpush.msra.mxu0 0.0
        %491 = vmatpush.msra.mxu0 0.0
        %492 = vmatpush.msra.mxu0 0.0
        %493 = vmatpush.msra.mxu0 0.0
        %494 = vmatpush.msra.mxu0 0.0
        %495 = vmatpush.msra.mxu0 0.0
        %496 = vmatpush.msra.mxu0 0.0
        %497 = vmatpush.msra.mxu0 0.0
        %v498 = vand.u32 %v343, 4294901760
        %499 = vmatpush.msra.mxu0 %v498
        %v500 = vand.u32 %v342, 4294901760
        %501 = vmatpush.msra.mxu0 %v500
        %v502 = vand.u32 %v346, 4294901760
        %503 = vmatmul.f32.gmra.mxu0 %v502
        %v504 = vpop.f32.mrf.mxu0
        %v505 = vadd.f32 %v482, %v504
        %506 = vdwg.mxu0
        %v507 = vld [vmem:[%s332] sm:$0xff]
        %508 = vset.pattern.permute.xlu0 0
        %509 = vperm.xlu0 %508, %v507
        %v510 = vpop.permute.xlu0 %509
        %vm511 = vcmp.eq.s32.totalorder %v334, %v510
        %s512 = sld [smem:[#allocation3]]
        %v513 = vstv %s512
        %v514 = vsel %vm511, %v513, 0.0
        %v515 = vadd.f32 %v514, 0.0
        %516 = vset.pattern.permute.xlu0 1
        %517 = vperm.xlu0 %516, %v507
        %v518 = vpop.permute.xlu0 %517
        %vm519 = vcmp.eq.s32.totalorder %v334, %v518
        %s520 = sld [smem:[#allocation3 + $0x1]]
        %v521 = vstv %s520
        %v522 = vsel %vm519, %v521, 0.0
        %v523 = vadd.f32 %v515, %v522
        %524 = vset.pattern.permute.xlu0 2
        %525 = vperm.xlu0 %524, %v507
        %v526 = vpop.permute.xlu0 %525
        %vm527 = vcmp.eq.s32.totalorder %v334, %v526
        %s528 = sld [smem:[#allocation3 + $0x2]]
        %v529 = vstv %s528
        %v530 = vsel %vm527, %v529, 0.0
        %v531 = vadd.f32 %v523, %v530
        %532 = vset.pattern.permute.xlu0 3
        %533 = vperm.xlu0 %532, %v507
        %v534 = vpop.permute.xlu0 %533
        %vm535 = vcmp.eq.s32.totalorder %v334, %v534
        %s536 = sld [smem:[#allocation3 + $0x3]]
        %v537 = vstv %s536
        %v538 = vsel %vm535, %v537, 0.0
        %v539 = vadd.f32 %v531, %v538
        %v540 = vld [vmem:[%s3] sm:$0xff]
        %v541 = vld [vmem:[%s3 + $0x8] sm:$0xff]
        %v542 = vld [vmem:[%s3 + $0x10] sm:$0xff]
        %s543 = sld [smem:[#allocation2]]
        %v544 = vstv %s543
        %vm545 = vcmask 195584
        %v547 = vsel %vm545, %v539, 0
        %549 = vmatpush.msra.mxu0 0.0
        %550 = vmatpush.msra.mxu0 0.0
        %551 = vmatpush.msra.mxu0 0.0
        %552 = vmatpush.msra.mxu0 0.0
        %553 = vmatpush.msra.mxu0 0.0
        %554 = vmatpush.msra.mxu0 0.0
        %555 = vmatpush.msra.mxu0 0.0
        %556 = vmatpush.msra.mxu0 0.0
        %557 = vmatpush.msra.mxu0 0.0
        %558 = vmatpush.msra.mxu0 0.0
        %559 = vmatpush.msra.mxu0 0.0
        %560 = vmatpush.msra.mxu0 0.0
        %561 = vmatpush.msra.mxu0 0.0
        %v562 = vand.u32 %v542, 4294901760
        %563 = vmatpush.msra.mxu0 %v562
        %v564 = vand.u32 %v541, 4294901760
        %565 = vmatpush.msra.mxu0 %v564
        %v566 = vand.u32 %v540, 4294901760
        %567 = vmatpush.msra.mxu0 %v566
        %v568 = vand.u32 %v547, 4294901760
        %v569 = vsub.f32 %v547, %v568
        %v570 = vand.u32 %v569, 4294901760
        %v571 = vsub.f32 %v569, %v570
        %v572 = vand.u32 %v571, 4294901760
        %573 = vmatmul.f32.gmra.mxu0 %v572
        %v574 = vpop.f32.mrf.mxu0
        %v575 = vadd.f32 %v544, %v574
        %576 = vdwg.mxu0
        %577 = vmatpush.msra.mxu0 0.0
        %578 = vmatpush.msra.mxu0 0.0
        %579 = vmatpush.msra.mxu0 0.0
        %580 = vmatpush.msra.mxu0 0.0
        %581 = vmatpush.msra.mxu0 0.0
        %582 = vmatpush.msra.mxu0 0.0
        %583 = vmatpush.msra.mxu0 0.0
        %584 = vmatpush.msra.mxu0 0.0
        %585 = vmatpush.msra.mxu0 0.0
        %586 = vmatpush.msra.mxu0 0.0
        %587 = vmatpush.msra.mxu0 0.0
        %588 = vmatpush.msra.mxu0 0.0
        %589 = vmatpush.msra.mxu0 0.0
        %v590 = vand.u32 %v542, 4294901760
        %v591 = vsub.f32 %v542, %v590
        %v592 = vand.u32 %v591, 4294901760
        %v593 = vsub.f32 %v591, %v592
        %v594 = vand.u32 %v593, 4294901760
        %595 = vmatpush.msra.mxu0 %v594
        %v596 = vand.u32 %v541, 4294901760
        %v597 = vsub.f32 %v541, %v596
        %v598 = vand.u32 %v597, 4294901760
        %v599 = vsub.f32 %v597, %v598
        %v600 = vand.u32 %v599, 4294901760
        %601 = vmatpush.msra.mxu0 %v600
        %v602 = vand.u32 %v540, 4294901760
        %v603 = vsub.f32 %v540, %v602
        %v604 = vand.u32 %v603, 4294901760
        %v605 = vsub.f32 %v603, %v604
        %v606 = vand.u32 %v605, 4294901760
        %607 = vmatpush.msra.mxu0 %v606
        %v608 = vand.u32 %v547, 4294901760
        %609 = vmatmul.f32.gmra.mxu0 %v608
        %v610 = vpop.f32.mrf.mxu0
        %v611 = vadd.f32 %v575, %v610
        %612 = vdwg.mxu0
        %613 = vmatpush.msra.mxu0 0.0
        %614 = vmatpush.msra.mxu0 0.0
        %615 = vmatpush.msra.mxu0 0.0
        %616 = vmatpush.msra.mxu0 0.0
        %617 = vmatpush.msra.mxu0 0.0
        %618 = vmatpush.msra.mxu0 0.0
        %619 = vmatpush.msra.mxu0 0.0
        %620 = vmatpush.msra.mxu0 0.0
        %621 = vmatpush.msra.mxu0 0.0
        %622 = vmatpush.msra.mxu0 0.0
        %623 = vmatpush.msra.mxu0 0.0
        %624 = vmatpush.msra.mxu0 0.0
        %625 = vmatpush.msra.mxu0 0.0
        %v626 = vand.u32 %v542, 4294901760
        %v627 = vsub.f32 %v542, %v626
        %628 = vmatpush.msra.mxu0 %v627
        %v629 = vand.u32 %v541, 4294901760
        %v630 = vsub.f32 %v541, %v629
        %631 = vmatpush.msra.mxu0 %v630
        %v632 = vand.u32 %v540, 4294901760
        %v633 = vsub.f32 %v540, %v632
        %634 = vmatpush.msra.mxu0 %v633
        %v635 = vand.u32 %v547, 4294901760
        %v636 = vsub.f32 %v547, %v635
        %637 = vmatmul.f32.gmra.mxu0 %v636
        %v638 = vpop.f32.mrf.mxu0
        %v639 = vadd.f32 %v611, %v638
        %640 = vdwg.mxu0
        %641 = vmatpush.msra.mxu0 0.0
        %642 = vmatpush.msra.mxu0 0.0
        %643 = vmatpush.msra.mxu0 0.0
        %644 = vmatpush.msra.mxu0 0.0
        %645 = vmatpush.msra.mxu0 0.0
        %646 = vmatpush.msra.mxu0 0.0
        %647 = vmatpush.msra.mxu0 0.0
        %648 = vmatpush.msra.mxu0 0.0
        %649 = vmatpush.msra.mxu0 0.0
        %650 = vmatpush.msra.mxu0 0.0
        %651 = vmatpush.msra.mxu0 0.0
        %652 = vmatpush.msra.mxu0 0.0
        %653 = vmatpush.msra.mxu0 0.0
        %v654 = vand.u32 %v542, 4294901760
        %655 = vmatpush.msra.mxu0 %v654
        %v656 = vand.u32 %v541, 4294901760
        %657 = vmatpush.msra.mxu0 %v656
        %v658 = vand.u32 %v540, 4294901760
        %659 = vmatpush.msra.mxu0 %v658
        %v660 = vand.u32 %v547, 4294901760
        %v661 = vsub.f32 %v547, %v660
        %v662 = vand.u32 %v661, 4294901760
        %663 = vmatmul.f32.gmra.mxu0 %v662
        %v664 = vpop.f32.mrf.mxu0
        %v665 = vadd.f32 %v639, %v664
        %666 = vdwg.mxu0
        %667 = vmatpush.msra.mxu0 0.0
        %668 = vmatpush.msra.mxu0 0.0
        %669 = vmatpush.msra.mxu0 0.0
        %670 = vmatpush.msra.mxu0 0.0
        %671 = vmatpush.msra.mxu0 0.0
        %672 = vmatpush.msra.mxu0 0.0
        %673 = vmatpush.msra.mxu0 0.0
        %674 = vmatpush.msra.mxu0 0.0
        %675 = vmatpush.msra.mxu0 0.0
        %676 = vmatpush.msra.mxu0 0.0
        %677 = vmatpush.msra.mxu0 0.0
        %678 = vmatpush.msra.mxu0 0.0
        %679 = vmatpush.msra.mxu0 0.0
        %v680 = vand.u32 %v542, 4294901760
        %v681 = vsub.f32 %v542, %v680
        %v682 = vand.u32 %v681, 4294901760
        %683 = vmatpush.msra.mxu0 %v682
        %v684 = vand.u32 %v541, 4294901760
        %v685 = vsub.f32 %v541, %v684
        %v686 = vand.u32 %v685, 4294901760
        %687 = vmatpush.msra.mxu0 %v686
        %v688 = vand.u32 %v540, 4294901760
        %v689 = vsub.f32 %v540, %v688
        %v690 = vand.u32 %v689, 4294901760
        %691 = vmatpush.msra.mxu0 %v690
        %v692 = vand.u32 %v547, 4294901760
        %693 = vmatmul.f32.gmra.mxu0 %v692
        %v694 = vpop.f32.mrf.mxu0
        %v695 = vadd.f32 %v665, %v694
        %696 = vdwg.mxu0
        %697 = vmatpush.msra.mxu0 0.0
        %698 = vmatpush.msra.mxu0 0.0
        %699 = vmatpush.msra.mxu0 0.0
        %700 = vmatpush.msra.mxu0 0.0
        %701 = vmatpush.msra.mxu0 0.0
        %702 = vmatpush.msra.mxu0 0.0
        %703 = vmatpush.msra.mxu0 0.0
        %704 = vmatpush.msra.mxu0 0.0
        %705 = vmatpush.msra.mxu0 0.0
        %706 = vmatpush.msra.mxu0 0.0
        %707 = vmatpush.msra.mxu0 0.0
        %708 = vmatpush.msra.mxu0 0.0
        %709 = vmatpush.msra.mxu0 0.0
        %v710 = vand.u32 %v542, 4294901760
        %711 = vmatpush.msra.mxu0 %v710
        %v712 = vand.u32 %v541, 4294901760
        %713 = vmatpush.msra.mxu0 %v712
        %v714 = vand.u32 %v540, 4294901760
        %715 = vmatpush.msra.mxu0 %v714
        %v716 = vand.u32 %v547, 4294901760
        %717 = vmatmul.f32.gmra.mxu0 %v716
        %v718 = vpop.f32.mrf.mxu0
        %v719 = vadd.f32 %v695, %v718
        %720 = vdwg.mxu0
        %v721 = vmul.f32 %v505, %v719
        %v722 = vld [vmem:[%s6] sm:$0xff]
        %v723 = vld [vmem:[%s6 + $0x8] sm:$0xff]
        %v724 = vld [vmem:[%s6 + $0x10] sm:$0xff]
        %v725 = vld [vmem:[%s6 + $0x18] sm:$0xff]
        %v726 = vld [vmem:[%s6 + $0x20] sm:$0xff]
        %v727 = vld [vmem:[%s6 + $0x28] sm:$0xff]
        %v728 = vld [vmem:[%s6 + $0x30] sm:$0xff]
        %v729 = vld [vmem:[%s6 + $0x38] sm:$0xff]
        %v730 = vld [vmem:[%s6 + $0x40] sm:$0xff]
        %v731 = vld [vmem:[%s6 + $0x48] sm:$0xff]
        %v732 = vld [vmem:[%s6 + $0x50] sm:$0xff]
        %v733 = vld [vmem:[%s6 + $0x58] sm:$0xff]
        %vm734 = vcmask 261120
        %v736 = vsel %vm734, %v721, 0
        %738 = vmatpush.msra.mxu0 0.0
        %739 = vmatpush.msra.mxu0 0.0
        %740 = vmatpush.msra.mxu0 0.0
        %741 = vmatpush.msra.mxu0 0.0
        %742 = vmatpush.msra.mxu0 0.0
        %743 = vmatpush.msra.mxu0 0.0
        %744 = vmatpush.msra.mxu0 0.0
        %745 = vmatpush.msra.mxu0 0.0
        %746 = vmatpush.msra.mxu0 0.0
        %747 = vmatpush.msra.mxu0 0.0
        %748 = vmatpush.msra.mxu0 0.0
        %749 = vmatpush.msra.mxu0 0.0
        %v750 = vand.u32 %v729, 4294901760
        %751 = vmatpush.msra.mxu0 %v750
        %v752 = vand.u32 %v728, 4294901760
        %753 = vmatpush.msra.mxu0 %v752
        %v754 = vand.u32 %v727, 4294901760
        %755 = vmatpush.msra.mxu0 %v754
        %v756 = vand.u32 %v726, 4294901760
        %757 = vmatpush.msra.mxu0 %v756
        %v758 = vand.u32 %v736, 4294901760
        %v759 = vsub.f32 %v736, %v758
        %v760 = vand.u32 %v759, 4294901760
        %v761 = vsub.f32 %v759, %v760
        %v762 = vand.u32 %v761, 4294901760
        %763 = vmatmul.f32.gmra.mxu0 %v762
        %v764 = vpop.f32.mrf.mxu0
        %v765 = vadd.f32 0.0, %v764
        %766 = vdwg.mxu0
        %767 = vmatpush.msra.mxu0 0.0
        %768 = vmatpush.msra.mxu0 0.0
        %769 = vmatpush.msra.mxu0 0.0
        %770 = vmatpush.msra.mxu0 0.0
        %771 = vmatpush.msra.mxu0 0.0
        %772 = vmatpush.msra.mxu0 0.0
        %773 = vmatpush.msra.mxu0 0.0
        %774 = vmatpush.msra.mxu0 0.0
        %775 = vmatpush.msra.mxu0 0.0
        %776 = vmatpush.msra.mxu0 0.0
        %777 = vmatpush.msra.mxu0 0.0
        %778 = vmatpush.msra.mxu0 0.0
        %v779 = vand.u32 %v729, 4294901760
        %v780 = vsub.f32 %v729, %v779
        %v781 = vand.u32 %v780, 4294901760
        %v782 = vsub.f32 %v780, %v781
        %v783 = vand.u32 %v782, 4294901760
        %784 = vmatpush.msra.mxu0 %v783
        %v785 = vand.u32 %v728, 4294901760
        %v786 = vsub.f32 %v728, %v785
        %v787 = vand.u32 %v786, 4294901760
        %v788 = vsub.f32 %v786, %v787
        %v789 = vand.u32 %v788, 4294901760
        %790 = vmatpush.msra.mxu0 %v789
        %v791 = vand.u32 %v727, 4294901760
        %v792 = vsub.f32 %v727, %v791
        %v793 = vand.u32 %v792, 4294901760
        %v794 = vsub.f32 %v792, %v793
        %v795 = vand.u32 %v794, 4294901760
        %796 = vmatpush.msra.mxu0 %v795
        %v797 = vand.u32 %v726, 4294901760
        %v798 = vsub.f32 %v726, %v797
        %v799 = vand.u32 %v798, 4294901760
        %v800 = vsub.f32 %v798, %v799
        %v801 = vand.u32 %v800, 4294901760
        %802 = vmatpush.msra.mxu0 %v801
        %v803 = vand.u32 %v736, 4294901760
        %804 = vmatmul.f32.gmra.mxu0 %v803
        %v805 = vpop.f32.mrf.mxu0
        %v806 = vadd.f32 %v765, %v805
        %807 = vdwg.mxu0
        %808 = vmatpush.msra.mxu0 0.0
        %809 = vmatpush.msra.mxu0 0.0
        %810 = vmatpush.msra.mxu0 0.0
        %811 = vmatpush.msra.mxu0 0.0
        %812 = vmatpush.msra.mxu0 0.0
        %813 = vmatpush.msra.mxu0 0.0
        %814 = vmatpush.msra.mxu0 0.0
        %815 = vmatpush.msra.mxu0 0.0
        %816 = vmatpush.msra.mxu0 0.0
        %817 = vmatpush.msra.mxu0 0.0
        %818 = vmatpush.msra.mxu0 0.0
        %819 = vmatpush.msra.mxu0 0.0
        %v820 = vand.u32 %v729, 4294901760
        %v821 = vsub.f32 %v729, %v820
        %822 = vmatpush.msra.mxu0 %v821
        %v823 = vand.u32 %v728, 4294901760
        %v824 = vsub.f32 %v728, %v823
        %825 = vmatpush.msra.mxu0 %v824
        %v826 = vand.u32 %v727, 4294901760
        %v827 = vsub.f32 %v727, %v826
        %828 = vmatpush.msra.mxu0 %v827
        %v829 = vand.u32 %v726, 4294901760
        %v830 = vsub.f32 %v726, %v829
        %831 = vmatpush.msra.mxu0 %v830
        %v832 = vand.u32 %v736, 4294901760
        %v833 = vsub.f32 %v736, %v832
        %834 = vmatmul.f32.gmra.mxu0 %v833
        %v835 = vpop.f32.mrf.mxu0
        %v836 = vadd.f32 %v806, %v835
        %837 = vdwg.mxu0
        %838 = vmatpush.msra.mxu0 0.0
        %839 = vmatpush.msra.mxu0 0.0
        %840 = vmatpush.msra.mxu0 0.0
        %841 = vmatpush.msra.mxu0 0.0
        %842 = vmatpush.msra.mxu0 0.0
        %843 = vmatpush.msra.mxu0 0.0
        %844 = vmatpush.msra.mxu0 0.0
        %845 = vmatpush.msra.mxu0 0.0
        %846 = vmatpush.msra.mxu0 0.0
        %847 = vmatpush.msra.mxu0 0.0
        %848 = vmatpush.msra.mxu0 0.0
        %849 = vmatpush.msra.mxu0 0.0
        %v850 = vand.u32 %v729, 4294901760
        %851 = vmatpush.msra.mxu0 %v850
        %v852 = vand.u32 %v728, 4294901760
        %853 = vmatpush.msra.mxu0 %v852
        %v854 = vand.u32 %v727, 4294901760
        %855 = vmatpush.msra.mxu0 %v854
        %v856 = vand.u32 %v726, 4294901760
        %857 = vmatpush.msra.mxu0 %v856
        %v858 = vand.u32 %v736, 4294901760
        %v859 = vsub.f32 %v736, %v858
        %v860 = vand.u32 %v859, 4294901760
        %861 = vmatmul.f32.gmra.mxu0 %v860
        %v862 = vpop.f32.mrf.mxu0
        %v863 = vadd.f32 %v836, %v862
        %864 = vdwg.mxu0
        %865 = vmatpush.msra.mxu0 0.0
        %866 = vmatpush.msra.mxu0 0.0
        %867 = vmatpush.msra.mxu0 0.0
        %868 = vmatpush.msra.mxu0 0.0
        %869 = vmatpush.msra.mxu0 0.0
        %870 = vmatpush.msra.mxu0 0.0
        %871 = vmatpush.msra.mxu0 0.0
        %872 = vmatpush.msra.mxu0 0.0
        %873 = vmatpush.msra.mxu0 0.0
        %874 = vmatpush.msra.mxu0 0.0
        %875 = vmatpush.msra.mxu0 0.0
        %876 = vmatpush.msra.mxu0 0.0
        %v877 = vand.u32 %v729, 4294901760
        %v878 = vsub.f32 %v729, %v877
        %v879 = vand.u32 %v878, 4294901760
        %880 = vmatpush.msra.mxu0 %v879
        %v881 = vand.u32 %v728, 4294901760
        %v882 = vsub.f32 %v728, %v881
        %v883 = vand.u32 %v882, 4294901760
        %884 = vmatpush.msra.mxu0 %v883
        %v885 = vand.u32 %v727, 4294901760
        %v886 = vsub.f32 %v727, %v885
        %v887 = vand.u32 %v886, 4294901760
        %888 = vmatpush.msra.mxu0 %v887
        %v889 = vand.u32 %v726, 4294901760
        %v890 = vsub.f32 %v726, %v889
        %v891 = vand.u32 %v890, 4294901760
        %892 = vmatpush.msra.mxu0 %v891
        %v893 = vand.u32 %v736, 4294901760
        %894 = vmatmul.f32.gmra.mxu0 %v893
        %v895 = vpop.f32.mrf.mxu0
        %v896 = vadd.f32 %v863, %v895
        %897 = vdwg.mxu0
        %898 = vmatpush.msra.mxu0 0.0
        %899 = vmatpush.msra.mxu0 0.0
        %900 = vmatpush.msra.mxu0 0.0
        %901 = vmatpush.msra.mxu0 0.0
        %902 = vmatpush.msra.mxu0 0.0
        %903 = vmatpush.msra.mxu0 0.0
        %904 = vmatpush.msra.mxu0 0.0
        %905 = vmatpush.msra.mxu0 0.0
        %906 = vmatpush.msra.mxu0 0.0
        %907 = vmatpush.msra.mxu0 0.0
        %908 = vmatpush.msra.mxu0 0.0
        %909 = vmatpush.msra.mxu0 0.0
        %v910 = vand.u32 %v729, 4294901760
        %911 = vmatpush.msra.mxu0 %v910
        %v912 = vand.u32 %v728, 4294901760
        %913 = vmatpush.msra.mxu0 %v912
        %v914 = vand.u32 %v727, 4294901760
        %915 = vmatpush.msra.mxu0 %v914
        %v916 = vand.u32 %v726, 4294901760
        %917 = vmatpush.msra.mxu0 %v916
        %v918 = vand.u32 %v736, 4294901760
        %919 = vmatmul.f32.gmra.mxu0 %v918
        %v920 = vpop.f32.mrf.mxu0
        %v921 = vadd.f32 %v896, %v920
        %922 = vdwg.mxu0
        %v924 = vsel %vm734, %v505, 0
        %926 = vmatpush.msra.mxu0 0.0
        %927 = vmatpush.msra.mxu0 0.0
        %928 = vmatpush.msra.mxu0 0.0
        %929 = vmatpush.msra.mxu0 0.0
        %930 = vmatpush.msra.mxu0 0.0
        %931 = vmatpush.msra.mxu0 0.0
        %932 = vmatpush.msra.mxu0 0.0
        %933 = vmatpush.msra.mxu0 0.0
        %934 = vmatpush.msra.mxu0 0.0
        %935 = vmatpush.msra.mxu0 0.0
        %936 = vmatpush.msra.mxu0 0.0
        %937 = vmatpush.msra.mxu0 0.0
        %v938 = vand.u32 %v725, 4294901760
        %939 = vmatpush.msra.mxu0 %v938
        %v940 = vand.u32 %v724, 4294901760
        %941 = vmatpush.msra.mxu0 %v940
        %v942 = vand.u32 %v723, 4294901760
        %943 = vmatpush.msra.mxu0 %v942
        %v944 = vand.u32 %v722, 4294901760
        %945 = vmatpush.msra.mxu0 %v944
        %v946 = vand.u32 %v924, 4294901760
        %v947 = vsub.f32 %v924, %v946
        %v948 = vand.u32 %v947, 4294901760
        %v949 = vsub.f32 %v947, %v948
        %v950 = vand.u32 %v949, 4294901760
        %951 = vmatmul.f32.gmra.mxu0 %v950
        %v952 = vpop.f32.mrf.mxu0
        %v953 = vadd.f32 %v921, %v952
        %954 = vdwg.mxu0
        %955 = vmatpush.msra.mxu0 0.0
        %956 = vmatpush.msra.mxu0 0.0
        %957 = vmatpush.msra.mxu0 0.0
        %958 = vmatpush.msra.mxu0 0.0
        %959 = vmatpush.msra.mxu0 0.0
        %960 = vmatpush.msra.mxu0 0.0
        %961 = vmatpush.msra.mxu0 0.0
        %962 = vmatpush.msra.mxu0 0.0
        %963 = vmatpush.msra.mxu0 0.0
        %964 = vmatpush.msra.mxu0 0.0
        %965 = vmatpush.msra.mxu0 0.0
        %966 = vmatpush.msra.mxu0 0.0
        %v967 = vand.u32 %v725, 4294901760
        %v968 = vsub.f32 %v725, %v967
        %v969 = vand.u32 %v968, 4294901760
        %v970 = vsub.f32 %v968, %v969
        %v971 = vand.u32 %v970, 4294901760
        %972 = vmatpush.msra.mxu0 %v971
        %v973 = vand.u32 %v724, 4294901760
        %v974 = vsub.f32 %v724, %v973
        %v975 = vand.u32 %v974, 4294901760
        %v976 = vsub.f32 %v974, %v975
        %v977 = vand.u32 %v976, 4294901760
        %978 = vmatpush.msra.mxu0 %v977
        %v979 = vand.u32 %v723, 4294901760
        %v980 = vsub.f32 %v723, %v979
        %v981 = vand.u32 %v980, 4294901760
        %v982 = vsub.f32 %v980, %v981
        %v983 = vand.u32 %v982, 4294901760
        %984 = vmatpush.msra.mxu0 %v983
        %v985 = vand.u32 %v722, 4294901760
        %v986 = vsub.f32 %v722, %v985
        %v987 = vand.u32 %v986, 4294901760
        %v988 = vsub.f32 %v986, %v987
        %v989 = vand.u32 %v988, 4294901760
        %990 = vmatpush.msra.mxu0 %v989
        %v991 = vand.u32 %v924, 4294901760
        %992 = vmatmul.f32.gmra.mxu0 %v991
        %v993 = vpop.f32.mrf.mxu0
        %v994 = vadd.f32 %v953, %v993
        %995 = vdwg.mxu0
        %996 = vmatpush.msra.mxu0 0.0
        %997 = vmatpush.msra.mxu0 0.0
        %998 = vmatpush.msra.mxu0 0.0
        %999 = vmatpush.msra.mxu0 0.0
        %1000 = vmatpush.msra.mxu0 0.0
        %1001 = vmatpush.msra.mxu0 0.0
        %1002 = vmatpush.msra.mxu0 0.0
        %1003 = vmatpush.msra.mxu0 0.0
        %1004 = vmatpush.msra.mxu0 0.0
        %1005 = vmatpush.msra.mxu0 0.0
        %1006 = vmatpush.msra.mxu0 0.0
        %1007 = vmatpush.msra.mxu0 0.0
        %v1008 = vand.u32 %v725, 4294901760
        %v1009 = vsub.f32 %v725, %v1008
        %1010 = vmatpush.msra.mxu0 %v1009
        %v1011 = vand.u32 %v724, 4294901760
        %v1012 = vsub.f32 %v724, %v1011
        %1013 = vmatpush.msra.mxu0 %v1012
        %v1014 = vand.u32 %v723, 4294901760
        %v1015 = vsub.f32 %v723, %v1014
        %1016 = vmatpush.msra.mxu0 %v1015
        %v1017 = vand.u32 %v722, 4294901760
        %v1018 = vsub.f32 %v722, %v1017
        %1019 = vmatpush.msra.mxu0 %v1018
        %v1020 = vand.u32 %v924, 4294901760
        %v1021 = vsub.f32 %v924, %v1020
        %1022 = vmatmul.f32.gmra.mxu0 %v1021
        %v1023 = vpop.f32.mrf.mxu0
        %v1024 = vadd.f32 %v994, %v1023
        %1025 = vdwg.mxu0
        %1026 = vmatpush.msra.mxu0 0.0
        %1027 = vmatpush.msra.mxu0 0.0
        %1028 = vmatpush.msra.mxu0 0.0
        %1029 = vmatpush.msra.mxu0 0.0
        %1030 = vmatpush.msra.mxu0 0.0
        %1031 = vmatpush.msra.mxu0 0.0
        %1032 = vmatpush.msra.mxu0 0.0
        %1033 = vmatpush.msra.mxu0 0.0
        %1034 = vmatpush.msra.mxu0 0.0
        %1035 = vmatpush.msra.mxu0 0.0
        %1036 = vmatpush.msra.mxu0 0.0
        %1037 = vmatpush.msra.mxu0 0.0
        %v1038 = vand.u32 %v725, 4294901760
        %1039 = vmatpush.msra.mxu0 %v1038
        %v1040 = vand.u32 %v724, 4294901760
        %1041 = vmatpush.msra.mxu0 %v1040
        %v1042 = vand.u32 %v723, 4294901760
        %1043 = vmatpush.msra.mxu0 %v1042
        %v1044 = vand.u32 %v722, 4294901760
        %1045 = vmatpush.msra.mxu0 %v1044
        %v1046 = vand.u32 %v924, 4294901760
        %v1047 = vsub.f32 %v924, %v1046
        %v1048 = vand.u32 %v1047, 4294901760
        %1049 = vmatmul.f32.gmra.mxu0 %v1048
        %v1050 = vpop.f32.mrf.mxu0
        %v1051 = vadd.f32 %v1024, %v1050
        %1052 = vdwg.mxu0
        %1053 = vmatpush.msra.mxu0 0.0
        %1054 = vmatpush.msra.mxu0 0.0
        %1055 = vmatpush.msra.mxu0 0.0
        %1056 = vmatpush.msra.mxu0 0.0
        %1057 = vmatpush.msra.mxu0 0.0
        %1058 = vmatpush.msra.mxu0 0.0
        %1059 = vmatpush.msra.mxu0 0.0
        %1060 = vmatpush.msra.mxu0 0.0
        %1061 = vmatpush.msra.mxu0 0.0
        %1062 = vmatpush.msra.mxu0 0.0
        %1063 = vmatpush.msra.mxu0 0.0
        %1064 = vmatpush.msra.mxu0 0.0
        %v1065 = vand.u32 %v725, 4294901760
        %v1066 = vsub.f32 %v725, %v1065
        %v1067 = vand.u32 %v1066, 4294901760
        %1068 = vmatpush.msra.mxu0 %v1067
        %v1069 = vand.u32 %v724, 4294901760
        %v1070 = vsub.f32 %v724, %v1069
        %v1071 = vand.u32 %v1070, 4294901760
        %1072 = vmatpush.msra.mxu0 %v1071
        %v1073 = vand.u32 %v723, 4294901760
        %v1074 = vsub.f32 %v723, %v1073
        %v1075 = vand.u32 %v1074, 4294901760
        %1076 = vmatpush.msra.mxu0 %v1075
        %v1077 = vand.u32 %v722, 4294901760
        %v1078 = vsub.f32 %v722, %v1077
        %v1079 = vand.u32 %v1078, 4294901760
        %1080 = vmatpush.msra.mxu0 %v1079
        %v1081 = vand.u32 %v924, 4294901760
        %1082 = vmatmul.f32.gmra.mxu0 %v1081
        %v1083 = vpop.f32.mrf.mxu0
        %v1084 = vadd.f32 %v1051, %v1083
        %1085 = vdwg.mxu0
        %1086 = vmatpush.msra.mxu0 0.0
        %1087 = vmatpush.msra.mxu0 0.0
        %1088 = vmatpush.msra.mxu0 0.0
        %1089 = vmatpush.msra.mxu0 0.0
        %1090 = vmatpush.msra.mxu0 0.0
        %1091 = vmatpush.msra.mxu0 0.0
        %1092 = vmatpush.msra.mxu0 0.0
        %1093 = vmatpush.msra.mxu0 0.0
        %1094 = vmatpush.msra.mxu0 0.0
        %1095 = vmatpush.msra.mxu0 0.0
        %1096 = vmatpush.msra.mxu0 0.0
        %1097 = vmatpush.msra.mxu0 0.0
        %v1098 = vand.u32 %v725, 4294901760
        %1099 = vmatpush.msra.mxu0 %v1098
        %v1100 = vand.u32 %v724, 4294901760
        %1101 = vmatpush.msra.mxu0 %v1100
        %v1102 = vand.u32 %v723, 4294901760
        %1103 = vmatpush.msra.mxu0 %v1102
        %v1104 = vand.u32 %v722, 4294901760
        %1105 = vmatpush.msra.mxu0 %v1104
        %v1106 = vand.u32 %v924, 4294901760
        %1107 = vmatmul.f32.gmra.mxu0 %v1106
        %v1108 = vpop.f32.mrf.mxu0
        %v1109 = vadd.f32 %v1084, %v1108
        %1110 = vdwg.mxu0
        %v1112 = vsel %vm734, %v719, 0
        %1114 = vmatpush.msra.mxu0 0.0
        %1115 = vmatpush.msra.mxu0 0.0
        %1116 = vmatpush.msra.mxu0 0.0
        %1117 = vmatpush.msra.mxu0 0.0
        %1118 = vmatpush.msra.mxu0 0.0
        %1119 = vmatpush.msra.mxu0 0.0
        %1120 = vmatpush.msra.mxu0 0.0
        %1121 = vmatpush.msra.mxu0 0.0
        %1122 = vmatpush.msra.mxu0 0.0
        %1123 = vmatpush.msra.mxu0 0.0
        %1124 = vmatpush.msra.mxu0 0.0
        %1125 = vmatpush.msra.mxu0 0.0
        %v1126 = vand.u32 %v733, 4294901760
        %1127 = vmatpush.msra.mxu0 %v1126
        %v1128 = vand.u32 %v732, 4294901760
        %1129 = vmatpush.msra.mxu0 %v1128
        %v1130 = vand.u32 %v731, 4294901760
        %1131 = vmatpush.msra.mxu0 %v1130
        %v1132 = vand.u32 %v730, 4294901760
        %1133 = vmatpush.msra.mxu0 %v1132
        %v1134 = vand.u32 %v1112, 4294901760
        %v1135 = vsub.f32 %v1112, %v1134
        %v1136 = vand.u32 %v1135, 4294901760
        %v1137 = vsub.f32 %v1135, %v1136
        %v1138 = vand.u32 %v1137, 4294901760
        %1139 = vmatmul.f32.gmra.mxu0 %v1138
        %v1140 = vpop.f32.mrf.mxu0
        %v1141 = vadd.f32 0.0, %v1140
        %1142 = vdwg.mxu0
        %1143 = vmatpush.msra.mxu0 0.0
        %1144 = vmatpush.msra.mxu0 0.0
        %1145 = vmatpush.msra.mxu0 0.0
        %1146 = vmatpush.msra.mxu0 0.0
        %1147 = vmatpush.msra.mxu0 0.0
        %1148 = vmatpush.msra.mxu0 0.0
        %1149 = vmatpush.msra.mxu0 0.0
        %1150 = vmatpush.msra.mxu0 0.0
        %1151 = vmatpush.msra.mxu0 0.0
        %1152 = vmatpush.msra.mxu0 0.0
        %1153 = vmatpush.msra.mxu0 0.0
        %1154 = vmatpush.msra.mxu0 0.0
        %v1155 = vand.u32 %v733, 4294901760
        %v1156 = vsub.f32 %v733, %v1155
        %v1157 = vand.u32 %v1156, 4294901760
        %v1158 = vsub.f32 %v1156, %v1157
        %v1159 = vand.u32 %v1158, 4294901760
        %1160 = vmatpush.msra.mxu0 %v1159
        %v1161 = vand.u32 %v732, 4294901760
        %v1162 = vsub.f32 %v732, %v1161
        %v1163 = vand.u32 %v1162, 4294901760
        %v1164 = vsub.f32 %v1162, %v1163
        %v1165 = vand.u32 %v1164, 4294901760
        %1166 = vmatpush.msra.mxu0 %v1165
        %v1167 = vand.u32 %v731, 4294901760
        %v1168 = vsub.f32 %v731, %v1167
        %v1169 = vand.u32 %v1168, 4294901760
        %v1170 = vsub.f32 %v1168, %v1169
        %v1171 = vand.u32 %v1170, 4294901760
        %1172 = vmatpush.msra.mxu0 %v1171
        %v1173 = vand.u32 %v730, 4294901760
        %v1174 = vsub.f32 %v730, %v1173
        %v1175 = vand.u32 %v1174, 4294901760
        %v1176 = vsub.f32 %v1174, %v1175
        %v1177 = vand.u32 %v1176, 4294901760
        %1178 = vmatpush.msra.mxu0 %v1177
        %v1179 = vand.u32 %v1112, 4294901760
        %1180 = vmatmul.f32.gmra.mxu0 %v1179
        %v1181 = vpop.f32.mrf.mxu0
        %v1182 = vadd.f32 %v1141, %v1181
        %1183 = vdwg.mxu0
        %1184 = vmatpush.msra.mxu0 0.0
        %1185 = vmatpush.msra.mxu0 0.0
        %1186 = vmatpush.msra.mxu0 0.0
        %1187 = vmatpush.msra.mxu0 0.0
        %1188 = vmatpush.msra.mxu0 0.0
        %1189 = vmatpush.msra.mxu0 0.0
        %1190 = vmatpush.msra.mxu0 0.0
        %1191 = vmatpush.msra.mxu0 0.0
        %1192 = vmatpush.msra.mxu0 0.0
        %1193 = vmatpush.msra.mxu0 0.0
        %1194 = vmatpush.msra.mxu0 0.0
        %1195 = vmatpush.msra.mxu0 0.0
        %v1196 = vand.u32 %v733, 4294901760
        %v1197 = vsub.f32 %v733, %v1196
        %1198 = vmatpush.msra.mxu0 %v1197
        %v1199 = vand.u32 %v732, 4294901760
        %v1200 = vsub.f32 %v732, %v1199
        %1201 = vmatpush.msra.mxu0 %v1200
        %v1202 = vand.u32 %v731, 4294901760
        %v1203 = vsub.f32 %v731, %v1202
        %1204 = vmatpush.msra.mxu0 %v1203
        %v1205 = vand.u32 %v730, 4294901760
        %v1206 = vsub.f32 %v730, %v1205
        %1207 = vmatpush.msra.mxu0 %v1206
        %v1208 = vand.u32 %v1112, 4294901760
        %v1209 = vsub.f32 %v1112, %v1208
        %1210 = vmatmul.f32.gmra.mxu0 %v1209
        %v1211 = vpop.f32.mrf.mxu0
        %v1212 = vadd.f32 %v1182, %v1211
        %1213 = vdwg.mxu0
        %1214 = vmatpush.msra.mxu0 0.0
        %1215 = vmatpush.msra.mxu0 0.0
        %1216 = vmatpush.msra.mxu0 0.0
        %1217 = vmatpush.msra.mxu0 0.0
        %1218 = vmatpush.msra.mxu0 0.0
        %1219 = vmatpush.msra.mxu0 0.0
        %1220 = vmatpush.msra.mxu0 0.0
        %1221 = vmatpush.msra.mxu0 0.0
        %1222 = vmatpush.msra.mxu0 0.0
        %1223 = vmatpush.msra.mxu0 0.0
        %1224 = vmatpush.msra.mxu0 0.0
        %1225 = vmatpush.msra.mxu0 0.0
        %v1226 = vand.u32 %v733, 4294901760
        %1227 = vmatpush.msra.mxu0 %v1226
        %v1228 = vand.u32 %v732, 4294901760
        %1229 = vmatpush.msra.mxu0 %v1228
        %v1230 = vand.u32 %v731, 4294901760
        %1231 = vmatpush.msra.mxu0 %v1230
        %v1232 = vand.u32 %v730, 4294901760
        %1233 = vmatpush.msra.mxu0 %v1232
        %v1234 = vand.u32 %v1112, 4294901760
        %v1235 = vsub.f32 %v1112, %v1234
        %v1236 = vand.u32 %v1235, 4294901760
        %1237 = vmatmul.f32.gmra.mxu0 %v1236
        %v1238 = vpop.f32.mrf.mxu0
        %v1239 = vadd.f32 %v1212, %v1238
        %1240 = vdwg.mxu0
        %1241 = vmatpush.msra.mxu0 0.0
        %1242 = vmatpush.msra.mxu0 0.0
        %1243 = vmatpush.msra.mxu0 0.0
        %1244 = vmatpush.msra.mxu0 0.0
        %1245 = vmatpush.msra.mxu0 0.0
        %1246 = vmatpush.msra.mxu0 0.0
        %1247 = vmatpush.msra.mxu0 0.0
        %1248 = vmatpush.msra.mxu0 0.0
        %1249 = vmatpush.msra.mxu0 0.0
        %1250 = vmatpush.msra.mxu0 0.0
        %1251 = vmatpush.msra.mxu0 0.0
        %1252 = vmatpush.msra.mxu0 0.0
        %v1253 = vand.u32 %v733, 4294901760
        %v1254 = vsub.f32 %v733, %v1253
        %v1255 = vand.u32 %v1254, 4294901760
        %1256 = vmatpush.msra.mxu0 %v1255
        %v1257 = vand.u32 %v732, 4294901760
        %v1258 = vsub.f32 %v732, %v1257
        %v1259 = vand.u32 %v1258, 4294901760
        %1260 = vmatpush.msra.mxu0 %v1259
        %v1261 = vand.u32 %v731, 4294901760
        %v1262 = vsub.f32 %v731, %v1261
        %v1263 = vand.u32 %v1262, 4294901760
        %1264 = vmatpush.msra.mxu0 %v1263
        %v1265 = vand.u32 %v730, 4294901760
        %v1266 = vsub.f32 %v730, %v1265
        %v1267 = vand.u32 %v1266, 4294901760
        %1268 = vmatpush.msra.mxu0 %v1267
        %v1269 = vand.u32 %v1112, 4294901760
        %1270 = vmatmul.f32.gmra.mxu0 %v1269
        %v1271 = vpop.f32.mrf.mxu0
        %v1272 = vadd.f32 %v1239, %v1271
        %1273 = vdwg.mxu0
        %1274 = vmatpush.msra.mxu0 0.0
        %1275 = vmatpush.msra.mxu0 0.0
        %1276 = vmatpush.msra.mxu0 0.0
        %1277 = vmatpush.msra.mxu0 0.0
        %1278 = vmatpush.msra.mxu0 0.0
        %1279 = vmatpush.msra.mxu0 0.0
        %1280 = vmatpush.msra.mxu0 0.0
        %1281 = vmatpush.msra.mxu0 0.0
        %1282 = vmatpush.msra.mxu0 0.0
        %1283 = vmatpush.msra.mxu0 0.0
        %1284 = vmatpush.msra.mxu0 0.0
        %1285 = vmatpush.msra.mxu0 0.0
        %v1286 = vand.u32 %v733, 4294901760
        %1287 = vmatpush.msra.mxu0 %v1286
        %v1288 = vand.u32 %v732, 4294901760
        %1289 = vmatpush.msra.mxu0 %v1288
        %v1290 = vand.u32 %v731, 4294901760
        %1291 = vmatpush.msra.mxu0 %v1290
        %v1292 = vand.u32 %v730, 4294901760
        %1293 = vmatpush.msra.mxu0 %v1292
        %v1294 = vand.u32 %v1112, 4294901760
        %1295 = vmatmul.f32.gmra.mxu0 %v1294
        %v1296 = vpop.f32.mrf.mxu0
        %v1297 = vadd.f32 %v1272, %v1296
        %1298 = vdwg.mxu0
        %v1299 = vadd.f32 %v1109, %v1297
        %v1300 = vld [vmem:[%s7] sm:$0x1]
        %v1302 = vperm.slane %v1300, 0
        %v1304 = vadd.f32 %v1299, %v1302
        %1305 = vst.msk [vmem:[%s324] sm:$0xff] %vm734, %v1304
        %s1306 = sand.u32 %s210, 1
        %s1307 = scalar_lea.sflag [#allocation4], %s1306
        %s1308 = sand.u32 %s210, 1
        %s1309 = smul.addr %s1308, 8
        %s1310 = scalar_lea.vmem [#allocation6], %s1309
        // Predicated region
        $region57: #{tpu_custom_call.1} parent=51 // pred_check
          %p1311 = pneg %p220
        $region58: #{tpu_custom_call.1} parent=51 // pred_check_branch
          %1313 = sbr.rel (%p1311) target = $region60
        $region59: #{tpu_custom_call.1} parent=51 // pred_region
          %1315 = vsyncadd %s1307, 0
          %s1316 = smul.addr %s24, 8
          %s1317 = scalar_lea.hbm %s8, %s1316
          %s1319 = sshll.u32 %s1310, 4
          %s1320 = int_to_ptr.vmem [resolvable:$true] %s1319
          %s1321 = sshll.u32 %s1317, 4
          %s1322 = int_to_ptr.hbm [resolvable:$true] %s1321
          %1324 = dma.vmem_to_hbm [thread:$0]  %s1320, 128, %s1322, %s1307
        $region60: #{tpu_custom_call.1} parent=51 // pred_fallthru
          _
      $region52: #{tpu_custom_call.1} parent=5 // pred_fallthru
        _
      %p1325 = scmp.le.s32.totalorder 2, %s19
      // Predicated region
      $region61: #{tpu_custom_call.1} parent=5 // pred_check
        %p1326 = pneg %p1325
      $region62: #{tpu_custom_call.1} parent=5 // pred_check_branch
        %1328 = sbr.rel (%p1326) target = $region64
      $region63: #{tpu_custom_call.1} parent=5 // pred_region
        %s1329 = ssub.s32 %s19, 2
        // Predicated region
        $region65: #{tpu_custom_call.1} parent=63 // pred_check
          %p1330 = pneg %p226
        $region66: #{tpu_custom_call.1} parent=63 // pred_check_branch
          %1332 = sbr.rel (%p1330) target = $region68
        $region67: #{tpu_custom_call.1} parent=63 // pred_region
          %s1333 = sand.u32 %s211, 1
          %s1334 = scalar_lea.sflag [#allocation4], %s1333
          %s1335 = sand.u32 %s211, 1
          %s1336 = smul.addr %s1335, 8
          %s1337 = scalar_lea.vmem [#allocation6], %s1336
          %1339 = dma.done %s1334, 128
        $region68: #{tpu_custom_call.1} parent=63 // pred_fallthru
          _
      $region64: #{tpu_custom_call.1} parent=5 // pred_fallthru
        _
    $region6: #{tpu_custom_call.1} parent=1 // loop_footer
      %s23 = sadd.s32 1, %s19
    $region7: #{tpu_custom_call.1} parent=1 // loop_footer_branch
      %18 = sbr.rel target = $region3
    $region8: #{tpu_custom_call.1} parent=1 // loop_exit
      _
    %1340 = vsyncpa [#allocation4], 1
    %s1341 = scalar_lea.sflag [#allocation4], 1
    %1342 = vsyncpa %s1341, 1
    %1343 = vsyncpa [#allocation5], 1
    %s1344 = scalar_lea.sflag [#allocation5], 1
    %1345 = vsyncpa %s1344, 1

</llo_original>
